<compile_context>
chip_gen: v7x
topology: tpu7x:2x2x1
jax: 0.10.0
libtpu: 0.0.40
codegen_flags: <defaults>
</compile_context>

<pallas_src>
import functools

import jax
import jax.numpy as jnp
import numpy as np
from jax import lax
from jax.experimental import pallas as pl
from jax.experimental.pallas import tpu as pltpu

# Safe on every current generation (v7x has 64 MiB VMEM / TensorCore).  On v5e/v6e
# (128 MiB VMEM) this can be raised toward ~96-112 MiB together with larger row tiles
# and windows-per-step.
_VMEM_LIMIT_BYTES = 40 * 1024 * 1024
# Budget for the f32 temporaries (scores / probs / LePE taps) of one attention grid step.
_ATTN_SCRATCH_BUDGET = 12 * 1024 * 1024


# --------------------------------------------------------------------------------------
# Projection kernels (MXU).  bf16 operands, f32 accumulation.
# --------------------------------------------------------------------------------------

def _qkv_linear_kernel(x_ref, w_ref, b_ref, o_ref):
    acc = jnp.dot(x_ref[...].astype(jnp.bfloat16), w_ref[...],
                  preferred_element_type=jnp.float32)
    o_ref[...] = (acc + b_ref[...].astype(jnp.float32)).astype(o_ref.dtype)


def _fused_proj_kernel(x1_ref, x2_ref, w1_ref, w2_ref, b_ref, o_ref):
    # out = x1 @ w_top + x2 @ w_bot + b  (branch concat fused away).
    acc = jnp.dot(x1_ref[...], w1_ref[...], preferred_element_type=jnp.float32)
    acc = acc + jnp.dot(x2_ref[...], w2_ref[...], preferred_element_type=jnp.float32)
    o_ref[...] = (acc + b_ref[...].astype(jnp.float32)).astype(o_ref.dtype)


def _pick_row_tile(m, tile_m_max=1024):
    """Row tile for the M-tiled projections: multiple of 8 (sublane) when tiling, and
    split into >= 2 grid steps when possible so both v7x TensorCores get work."""
    tm = min(tile_m_max, m)
    if m > 8 and pl.cdiv(m, tm) < 2:
        tm = max(8, ((m + 1) // 2 + 7) // 8 * 8)
    if tm < m:
        tm = max(8, (tm // 8) * 8)
    return tm


def qkv_linear(x, w, b, *, tile_m_max=1024):
    """x: (M, K), w: (K, 3K) bf16 (attention scale pre-folded into the q columns),
    b: (3K,) f32  ->  (M, 3K) bf16."""
    M, K = x.shape
    N = w.shape[1]
    tm = _pick_row_tile(M, tile_m_max)
    # NOTE: if M is not a multiple of tm, the ragged last row block feeds out-of-range rows
    # into the MXU; this is safe only because the out_spec writeback masks those rows and
    # there is no cross-step accumulation in this kernel.
    return pl.pallas_call(
        _qkv_linear_kernel,
        out_shape=jax.ShapeDtypeStruct((M, N), jnp.bfloat16),
        grid=(pl.cdiv(M, tm),),
        in_specs=[pl.BlockSpec((tm, K), lambda i: (i, 0)),
                  pl.BlockSpec((K, N), lambda i: (0, 0)),
                  pl.BlockSpec((1, N), lambda i: (0, 0))],
        out_specs=pl.BlockSpec((tm, N), lambda i: (i, 0)),
        compiler_params=pltpu.CompilerParams(
            dimension_semantics=("parallel",),
            vmem_limit_bytes=_VMEM_LIMIT_BYTES),
    )(x, w, b.reshape(1, N))


def fused_proj(x1, x2, w1, w2, b, *, tile_m_max=1024):
    """out = x1 @ w1 + x2 @ w2 + b, f32 output.  x1/x2 are the two branch outputs (bf16)."""
    M, Ch = x1.shape
    N = w1.shape[1]
    tm = _pick_row_tile(M, tile_m_max)
    row_spec = pl.BlockSpec((tm, Ch), lambda i: (i, 0))
    w_spec = pl.BlockSpec((Ch, N), lambda i: (0, 0))
    return pl.pallas_call(
        _fused_proj_kernel,
        out_shape=jax.ShapeDtypeStruct((M, N), jnp.float32),
        grid=(pl.cdiv(M, tm),),
        in_specs=[row_spec, row_spec, w_spec, w_spec,
                  pl.BlockSpec((1, N), lambda i: (0, 0))],
        out_specs=pl.BlockSpec((tm, N), lambda i: (i, 0)),
        compiler_params=pltpu.CompilerParams(
            dimension_semantics=("parallel",),
            vmem_limit_bytes=_VMEM_LIMIT_BYTES),
    )(x1, x2, w1, w2, b.reshape(1, N))


# --------------------------------------------------------------------------------------
# Fused (LePE depthwise-3x3 conv + windowed multi-head attention) kernel.
# One grid step = `wr` row-strip windows of one batch element.  Heads of all windows of
# the step are batched into a single dot_general pair; a single lane-dense full-width
# store writes the heads-merged result straight back into the (B, HH, WW, Ch) image.
# --------------------------------------------------------------------------------------

def _shift_zero(x, d, axis):
    """out[..., i, ...] = x[..., i + d, ...], zero-filled where i + d is out of range."""
    if d == 0:
        return x
    n = x.shape[axis]
    pad_shape = list(x.shape)
    pad_shape[axis] = abs(d)
    zeros = jnp.zeros(pad_shape, x.dtype)
    idx = [slice(None)] * x.ndim
    if d > 0:
        idx[axis] = slice(d, n)
        return jnp.concatenate([x[tuple(idx)], zeros], axis=axis)
    idx[axis] = slice(0, n + d)
    return jnp.concatenate([zeros, x[tuple(idx)]], axis=axis)


def _window_attn_lepe_kernel(q_ref, k_ref, v_ref, w_ref, b_ref, o_ref, *, hsp, num_heads):
    f32 = jnp.float32
    _, RB, WW, Ch = q_ref.shape          # block = (1, wr*hsp, WW, Ch), bf16
    wr = RB // hsp                       # windows handled this grid step
    S = hsp * WW                         # tokens per window
    nh = num_heads
    hd = Ch // nh

    # Token views (row-major-compatible reshapes; VMEM-local).
    qt = q_ref[0].reshape(wr, S, Ch)     # bf16; q already carries the attention scale
    kt = k_ref[0].reshape(wr, S, Ch)
    vt = v_ref[0].reshape(wr, S, Ch)
    vs = v_ref[0].reshape(wr, hsp, WW, Ch).astype(f32)   # spatial view for the LePE conv

    # ---- LePE: depthwise 3x3 conv, per-window zero padding (9 shifted f32 VPU MACs) ----
    # Horizontal (sublane-axis) shifts are computed once and reused for all three rows;
    # vertical shifts act on the per-window axis so stacked windows never leak into each
    # other.  (A pltpu.roll + edge-mask variant would move the shifts onto the XLU slot.)
    h_taps = [_shift_zero(vs, dw, axis=2) for dw in (-1, 0, 1)]
    lepe = jnp.zeros((wr, hsp, WW, Ch), f32) + b_ref[0].astype(f32)
    for r in range(3):
        for c in range(3):
            tap = _shift_zero(h_taps[c], r - 1, axis=1)
            lepe = lepe + tap * w_ref[r, c, :].astype(f32)

    # ---- Attention: all heads of all wr windows batched into one dot_general pair ----
    def split_heads(x):   # (wr, S, Ch) -> (nh*wr, S, hd); batch index = head*wr + window
        if nh == 1:
            return x
        return jnp.concatenate([x[:, :, h * hd:(h + 1) * hd] for h in range(nh)], axis=0)

    qh = split_heads(qt)
    kh = split_heads(kt)
    vh = split_heads(vt)

    s = lax.dot_general(qh, kh, (((2,), (2,)), ((0,), (0,))),
                        preferred_element_type=f32)                    # (nh*wr, S, S)
    s = s - jnp.max(s, axis=-1, keepdims=True)
    p = jnp.exp(s)
    inv = pl.reciprocal(jnp.sum(p, axis=-1, keepdims=True), approx=True)   # EUP slot
    ctx = lax.dot_general(p.astype(vh.dtype), vh, (((2,), (1,)), ((0,), (0,))),
                          preferred_element_type=f32)                  # (nh*wr, S, hd)
    ctx = ctx * inv

    if nh == 1:
        merged = ctx
    else:   # merge heads back to channel-major order (head h -> channels [h*hd, (h+1)*hd))
        merged = jnp.concatenate([ctx[h * wr:(h + 1) * wr] for h in range(nh)], axis=-1)

    out = merged.reshape(wr, hsp, WW, Ch) + lepe
    # Single lane-dense full-width store per grid step.
    o_ref[...] = out.reshape(o_ref.shape).astype(o_ref.dtype)


def _pick_windows_per_step(batch, nwin, S, Ch, nh, budget_bytes=_ATTN_SCRATCH_BUDGET):
    """Largest divisor of nwin whose f32 temporaries fit the budget, keeping >= 2 grid steps."""
    per_win = 2 * nh * S * S * 4 + 16 * S * Ch * 4
    best = 1
    for wr in range(1, nwin + 1):
        if nwin % wr:
            continue
        if wr * per_win > budget_bytes:
            continue
        if batch * (nwin // wr) < 2 and wr > 1:
            continue
        best = wr
    return best


def lepe_attention_branch(q, k, v, conv_w, conv_b, *, hsp, num_heads):
    """One LePEAttention branch on row-strip windows of height `hsp`.

    q/k/v: (B, HH, WW, Ch) bf16 with q pre-scaled (scale folded into the qkv weights).
    Windows are the HH/hsp horizontal strips; blocks span the full trailing (WW, Ch) dims
    so the window gather/scatter is pure BlockSpec indexing (no transpose round trips).
    Returns (B, HH, WW, Ch) bf16.
    """
    B, HH, WW, Ch = q.shape
    assert HH % hsp == 0
    nwin = HH // hsp
    wr = _pick_windows_per_step(B, nwin, hsp * WW, Ch, num_heads)
    rb = wr * hsp
    blk = pl.BlockSpec((1, rb, WW, Ch), lambda b, i: (b, i, 0, 0))
    return pl.pallas_call(
        functools.partial(_window_attn_lepe_kernel, hsp=hsp, num_heads=num_heads),
        out_shape=jax.ShapeDtypeStruct((B, HH, WW, Ch), jnp.bfloat16),
        grid=(B, nwin // wr),
        in_specs=[blk, blk, blk,
                  pl.BlockSpec((3, 3, Ch), lambda b, i: (0, 0, 0)),
                  pl.BlockSpec((1, Ch), lambda b, i: (0, 0))],
        out_specs=blk,
        compiler_params=pltpu.CompilerParams(
            dimension_semantics=("parallel", "parallel"),
            vmem_limit_bytes=_VMEM_LIMIT_BYTES),
    )(q, k, v, conv_w, conv_b.reshape(1, Ch))


# --------------------------------------------------------------------------------------
# Parameter preprocessing (one-time) and forward pass.
# --------------------------------------------------------------------------------------

def preprocess_params(params, *, dim, num_heads):
    """One-time transform: fold the attention scale into the q columns of the qkv
    projection, pre-transpose the branch-0 conv kernel into its transposed frame, and
    cast the MXU-side weights to bf16."""
    C = dim
    Ch = C // 2
    scale = (C // num_heads) ** (-0.5)
    w_qkv = params['w_qkv'].at[:, :C].multiply(scale)
    b_qkv = params['b_qkv'].at[:C].multiply(scale)
    return dict(
        w_qkv=w_qkv.astype(jnp.bfloat16),
        b_qkv=b_qkv.astype(jnp.float32),
        w_proj_top=params['w_proj'][:Ch].astype(jnp.bfloat16),
        w_proj_bot=params['w_proj'][Ch:].astype(jnp.bfloat16),
        b_proj=params['b_proj'].astype(jnp.float32),
        conv_w0_t=params['conv_w0'].transpose(1, 0, 2).astype(jnp.float32),
        conv_b0=params['conv_b0'].astype(jnp.float32),
        conv_w1=params['conv_w1'].astype(jnp.float32),
        conv_b1=params['conv_b1'].astype(jnp.float32),
    )


def cross_window_attention(x, pp, *, resolution, split_size, num_heads):
    """x: (B, L, C) with L = resolution**2.  pp = preprocess_params(...)."""
    B, L, C = x.shape
    H = W = resolution
    assert L == H * W and C % 2 == 0 and num_heads % 2 == 0
    assert resolution % split_size == 0
    Ch = C // 2
    nh = num_heads // 2

    y = qkv_linear(x.reshape(B * L, C), pp['w_qkv'], pp['b_qkv'])     # (B*L, 3C) bf16
    y = y.reshape(B, H, W, 3 * C)

    # q|k|v column layout of the qkv projection; first/second channel halves per branch.
    # Branch 1 (idx=1: H_sp=split, W_sp=res) keeps the natural (B, H, W, Ch) frame.
    q1 = y[..., 0 * C + Ch:1 * C]
    k1 = y[..., 1 * C + Ch:2 * C]
    v1 = y[..., 2 * C + Ch:3 * C]
    # Branch 0 (idx=0: H_sp=res, W_sp=split) is evaluated in a spatially transposed frame
    # so its column-strip windows become row strips (full-trailing-dim BlockSpecs).
    q0 = y[..., 0 * C:0 * C + Ch].transpose(0, 2, 1, 3)               # (B, W, H, Ch)
    k0 = y[..., 1 * C:1 * C + Ch].transpose(0, 2, 1, 3)
    v0 = y[..., 2 * C:2 * C + Ch].transpose(0, 2, 1, 3)

    x0t = lepe_attention_branch(q0, k0, v0, pp['conv_w0_t'], pp['conv_b0'],
                                hsp=split_size, num_heads=nh)          # (B, W, H, Ch)
    x1 = lepe_attention_branch(q1, k1, v1, pp['conv_w1'], pp['conv_b1'],
                               hsp=split_size, num_heads=nh)           # (B, H, W, Ch)
    x0 = x0t.transpose(0, 2, 1, 3)                                     # back to (B, H, W, Ch)

    out = fused_proj(x0.reshape(B * L, Ch), x1.reshape(B * L, Ch),
                     pp['w_proj_top'], pp['w_proj_bot'], pp['b_proj'])
    return out.reshape(B, L, C)
    # attn_drop / proj_drop are nn.Dropout(p=0.0) => identity.


# --------------------------------------------------------------------------------------
# Pure-JAX reference (exact f32) for correctness checking.
# --------------------------------------------------------------------------------------

def _to_windows(x, H, W, H_sp, W_sp):
    B, L, C = x.shape
    x = x.reshape(B, H // H_sp, H_sp, W // W_sp, W_sp, C)
    x = x.transpose(0, 1, 3, 2, 4, 5)
    return x.reshape(-1, H_sp, W_sp, C)


def _heads(x_win, nh):
    Bw, H_sp, W_sp, C = x_win.shape
    hd = C // nh
    return x_win.reshape(Bw, H_sp * W_sp, nh, hd).transpose(0, 2, 1, 3)


def _windows2img(x_win, H_sp, W_sp, H, W):
    Bw, S, C = x_win.shape
    B = Bw // ((H // H_sp) * (W // W_sp))
    x = x_win.reshape(B, H // H_sp, W // W_sp, H_sp, W_sp, C)
    x = x.transpose(0, 1, 3, 2, 4, 5)
    return x.reshape(B, H * W, C)


def _ref_dwconv(x_nhwc, w, b):
    C = x_nhwc.shape[-1]
    w_hwio = w[:, :, None, :]
    y = lax.conv_general_dilated(x_nhwc, w_hwio, (1, 1), 'SAME',
                                 dimension_numbers=('NHWC', 'HWIO', 'NHWC'),
                                 feature_group_count=C)
    return y + b


def _ref_lepe(qkv, H, W, H_sp, W_sp, nh, conv_w, conv_b):
    q, k, v = qkv[0], qkv[1], qkv[2]
    B, L, C = q.shape
    hd = C // nh
    scale = hd ** (-0.5)
    qw = _heads(_to_windows(q, H, W, H_sp, W_sp), nh) * scale
    kw = _heads(_to_windows(k, H, W, H_sp, W_sp), nh)
    v_nhwc = _to_windows(v, H, W, H_sp, W_sp)
    lepew = _heads(_ref_dwconv(v_nhwc, conv_w, conv_b), nh)
    vw = _heads(v_nhwc, nh)
    attn = jax.nn.softmax(jnp.einsum('bhqd,bhkd->bhqk', qw, kw), axis=-1)
    ow = jnp.einsum('bhqk,bhkd->bhqd', attn, vw) + lepew
    ow = ow.transpose(0, 2, 1, 3).reshape(-1, H_sp * W_sp, C)
    return _windows2img(ow, H_sp, W_sp, H, W)


def _ref_forward(x, params, *, resolution, split_size, num_heads):
    B, L, C = x.shape
    y = x.reshape(B * L, C) @ params['w_qkv'] + params['b_qkv']
    qkv = y.reshape(B, L, 3, C).transpose(2, 0, 1, 3)
    half = C // 2
    nh = num_heads // 2
    x1 = _ref_lepe(qkv[..., :half], resolution, resolution, resolution, split_size, nh,
                   params['conv_w0'], params['conv_b0'])
    x2 = _ref_lepe(qkv[..., half:], resolution, resolution, split_size, resolution, nh,
                   params['conv_w1'], params['conv_b1'])
    xc = jnp.concatenate([x1, x2], axis=2)
    out = xc.reshape(B * L, C) @ params['w_proj'] + params['b_proj']
    return out.reshape(B, L, C)


# --------------------------------------------------------------------------------------

if __name__ == "__main__":
    # Small shapes consistent with the module's forward.
    B, dim, res, split_size, num_heads = 2, 16, 8, 4, 4
    L = res * res                                     # 64 tokens

    key = jax.random.PRNGKey(0)
    ks = jax.random.split(key, 9)
    params = dict(
        w_qkv=0.1 * jax.random.normal(ks[0], (dim, 3 * dim), jnp.float32),
        b_qkv=0.1 * jax.random.normal(ks[1], (3 * dim,), jnp.float32),
        w_proj=0.1 * jax.random.normal(ks[2], (dim, dim), jnp.float32),
        b_proj=0.1 * jax.random.normal(ks[3], (dim,), jnp.float32),
        conv_w0=0.1 * jax.random.normal(ks[4], (3, 3, dim // 2), jnp.float32),
        conv_b0=0.1 * jax.random.normal(ks[5], (dim // 2,), jnp.float32),
        conv_w1=0.1 * jax.random.normal(ks[6], (3, 3, dim // 2), jnp.float32),
        conv_b1=0.1 * jax.random.normal(ks[7], (dim // 2,), jnp.float32),
    )
    x = jax.random.normal(ks[8], (B, L, dim), jnp.float32)

    pp = preprocess_params(params, dim=dim, num_heads=num_heads)      # one-time transform
    fwd = jax.jit(functools.partial(cross_window_attention, resolution=res,
                                    split_size=split_size, num_heads=num_heads))
    out = jax.block_until_ready(fwd(x, pp))
    assert out.shape == (B, L, dim)

    ref = _ref_forward(x, params, resolution=res, split_size=split_size,
                       num_heads=num_heads)
    # Tolerance reflects bf16 MXU operands / bf16 HBM intermediates and the EUP
    # approximate-reciprocal softmax denominator; accumulation and elementwise math stay f32.
    np.testing.assert_allclose(np.asarray(out), np.asarray(ref), atol=2e-2, rtol=2e-2)
    print("KERNEL_OK")
</pallas_src>

<mosaic_0001>
module attributes {stable_mosaic.version = 11 : i64} {
  func.func @_qkv_linear_kernel(%arg0: i32, %arg1: memref<64x16xf32, #tpu.memory_space<vmem>>, %arg2: memref<16x48xbf16, #tpu.memory_space<vmem>>, %arg3: memref<1x48xf32, #tpu.memory_space<vmem>>, %arg4: memref<64x48xbf16, #tpu.memory_space<vmem>>) attributes {dimension_semantics = [#tpu.dimension_semantics<parallel>], iteration_bounds = array<i64: 2>, scalar_prefetch = 0 : i64, scratch_operands = 0 : i64, tpu.core_type = #tpu.core_type<tc>, window_params = [{transform_indices = @transform_0, window_bounds = array<i64: 64, 16>}, {pipeline_mode = #tpu.pipeline_mode<synchronous>, transform_indices = @transform_1, window_bounds = array<i64: 16, 48>}, {pipeline_mode = #tpu.pipeline_mode<synchronous>, transform_indices = @transform_2, window_bounds = array<i64: 1, 48>}, {transform_indices = @transform_3, window_bounds = array<i64: 64, 48>}]} {
    %c0 = arith.constant 0 : index
    %c0_0 = arith.constant 0 : index
    %0 = vector.load %arg1[%c0, %c0_0] : memref<64x16xf32, #tpu.memory_space<vmem>>, vector<64x16xf32>
    %1 = arith.truncf %0 : vector<64x16xf32> to vector<64x16xbf16>
    %c0_1 = arith.constant 0 : index
    %c0_2 = arith.constant 0 : index
    %2 = vector.load %arg2[%c0_1, %c0_2] : memref<16x48xbf16, #tpu.memory_space<vmem>>, vector<16x48xbf16>
    %cst = arith.constant dense<0.000000e+00> : vector<64x48xf32>
    %3 = tpu.matmul %1, %2, %cst {dimension_numbers = #tpu.dot_dimension_numbers<[1], [0], [0], [1], [0, 0, 1, 1], [], []>} : vector<64x16xbf16>, vector<16x48xbf16>, vector<64x48xf32> -> vector<64x48xf32>
    %c0_3 = arith.constant 0 : index
    %c0_4 = arith.constant 0 : index
    %4 = vector.load %arg3[%c0_3, %c0_4] : memref<1x48xf32, #tpu.memory_space<vmem>>, vector<1x48xf32>
    %5 = vector.broadcast %4 : vector<1x48xf32> to vector<64x48xf32>
    %6 = arith.addf %3, %5 : vector<64x48xf32>
    %7 = arith.truncf %6 : vector<64x48xf32> to vector<64x48xbf16>
    %c0_5 = arith.constant 0 : index
    %c0_6 = arith.constant 0 : index
    %8 = vector.load %arg4[%c0_5, %c0_6] : memref<64x48xbf16, #tpu.memory_space<vmem>>, vector<64x48xbf16>
    tpu.vector_store %arg4[%c0_5, %c0_6], %7 {strides = array<i32>} : memref<64x48xbf16, #tpu.memory_space<vmem>>, vector<64x48xbf16>,
    return
  }
  func.func @transform_0(%arg0: i32) -> (i32, i32) {
    %c0_i32 = arith.constant 0 : i32
    %c0_i32_0 = arith.constant 0 : i32
    return %arg0, %c0_i32 : i32, i32
  }
  func.func @transform_1(%arg0: i32) -> (i32, i32) {
    %c0_i32 = arith.constant 0 : i32
    %c0_i32_0 = arith.constant 0 : i32
    %c0_i32_1 = arith.constant 0 : i32
    return %c0_i32, %c0_i32_0 : i32, i32
  }
  func.func @transform_2(%arg0: i32) -> (i32, i32) {
    %c0_i32 = arith.constant 0 : i32
    %c0_i32_0 = arith.constant 0 : i32
    %c0_i32_1 = arith.constant 0 : i32
    return %c0_i32, %c0_i32_0 : i32, i32
  }
  func.func @transform_3(%arg0: i32) -> (i32, i32) {
    %c0_i32 = arith.constant 0 : i32
    %c0_i32_0 = arith.constant 0 : i32
    return %arg0, %c0_i32 : i32, i32
  }
}

module attributes {stable_mosaic.version = 11 : i64} {
  func.func @_window_attn_lepe_kernel(%arg0: i32, %arg1: i32, %arg2: memref<1x8x8x8xbf16, #tpu.memory_space<vmem>>, %arg3: memref<1x8x8x8xbf16, #tpu.memory_space<vmem>>, %arg4: memref<1x8x8x8xbf16, #tpu.memory_space<vmem>>, %arg5: memref<3x3x8xf32, #tpu.memory_space<vmem>>, %arg6: memref<1x8xf32, #tpu.memory_space<vmem>>, %arg7: memref<1x8x8x8xbf16, #tpu.memory_space<vmem>>) attributes {dimension_semantics = [#tpu.dimension_semantics<parallel>, #tpu.dimension_semantics<parallel>], iteration_bounds = array<i64: 2, 1>, scalar_prefetch = 0 : i64, scratch_operands = 0 : i64, tpu.core_type = #tpu.core_type<tc>, window_params = [{transform_indices = @transform_0, window_bounds = array<i64: 1, 8, 8, 8>}, {transform_indices = @transform_1, window_bounds = array<i64: 1, 8, 8, 8>}, {transform_indices = @transform_2, window_bounds = array<i64: 1, 8, 8, 8>}, {pipeline_mode = #tpu.pipeline_mode<synchronous>, transform_indices = @transform_3, window_bounds = array<i64: 3, 3, 8>}, {pipeline_mode = #tpu.pipeline_mode<synchronous>, transform_indices = @transform_4, window_bounds = array<i64: 1, 8>}, {transform_indices = @transform_5, window_bounds = array<i64: 1, 8, 8, 8>}]} {
    %c0 = arith.constant 0 : index
    %c0_0 = arith.constant 0 : index
    %c0_1 = arith.constant 0 : index
    %c0_2 = arith.constant 0 : index
    %0 = vector.load %arg2[%c0, %c0_0, %c0_1, %c0_2] : memref<1x8x8x8xbf16, #tpu.memory_space<vmem>>, vector<1x8x8x8xbf16>
    %1 = vector.shape_cast %0 : vector<1x8x8x8xbf16> to vector<8x8x8xbf16>
    %2 = vector.shape_cast %1 : vector<8x8x8xbf16> to vector<2x32x8xbf16>
    %c0_3 = arith.constant 0 : index
    %c0_4 = arith.constant 0 : index
    %c0_5 = arith.constant 0 : index
    %c0_6 = arith.constant 0 : index
    %3 = vector.load %arg3[%c0_3, %c0_4, %c0_5, %c0_6] : memref<1x8x8x8xbf16, #tpu.memory_space<vmem>>, vector<1x8x8x8xbf16>
    %4 = vector.shape_cast %3 : vector<1x8x8x8xbf16> to vector<8x8x8xbf16>
    %5 = vector.shape_cast %4 : vector<8x8x8xbf16> to vector<2x32x8xbf16>
    %c0_7 = arith.constant 0 : index
    %c0_8 = arith.constant 0 : index
    %c0_9 = arith.constant 0 : index
    %c0_10 = arith.constant 0 : index
    %6 = vector.load %arg4[%c0_7, %c0_8, %c0_9, %c0_10] : memref<1x8x8x8xbf16, #tpu.memory_space<vmem>>, vector<1x8x8x8xbf16>
    %7 = vector.shape_cast %6 : vector<1x8x8x8xbf16> to vector<8x8x8xbf16>
    %8 = vector.shape_cast %7 : vector<8x8x8xbf16> to vector<2x32x8xbf16>
    %c0_11 = arith.constant 0 : index
    %c0_12 = arith.constant 0 : index
    %c0_13 = arith.constant 0 : index
    %c0_14 = arith.constant 0 : index
    %9 = vector.load %arg4[%c0_11, %c0_12, %c0_13, %c0_14] : memref<1x8x8x8xbf16, #tpu.memory_space<vmem>>, vector<1x8x8x8xbf16>
    %10 = vector.shape_cast %9 : vector<1x8x8x8xbf16> to vector<8x8x8xbf16>
    %11 = vector.shape_cast %10 : vector<8x8x8xbf16> to vector<2x4x8x8xbf16>
    %12 = arith.extf %11 : vector<2x4x8x8xbf16> to vector<2x4x8x8xf32>
    %cst = arith.constant 0.000000e+00 : f32
    %13 = vector.broadcast %cst : f32 to vector<2x4x1x8xf32>
    %14 = vector.extract_strided_slice %12 {offsets = [0, 0, 0, 0], sizes = [2, 4, 7, 8], strides = [1, 1, 1, 1]} : vector<2x4x8x8xf32> to vector<2x4x7x8xf32>
    %15 = tpu.concatenate %13, %14 in 2 : vector<2x4x1x8xf32>, vector<2x4x7x8xf32> -> vector<2x4x8x8xf32>
    %cst_15 = arith.constant 0.000000e+00 : f32
    %16 = vector.broadcast %cst_15 : f32 to vector<2x4x1x8xf32>
    %17 = vector.extract_strided_slice %12 {offsets = [0, 0, 1, 0], sizes = [2, 4, 7, 8], strides = [1, 1, 1, 1]} : vector<2x4x8x8xf32> to vector<2x4x7x8xf32>
    %18 = tpu.concatenate %17, %16 in 2 : vector<2x4x7x8xf32>, vector<2x4x1x8xf32> -> vector<2x4x8x8xf32>
    %cst_16 = arith.constant 0.000000e+00 : f32
    %19 = vector.broadcast %cst_16 : f32 to vector<2x4x8x8xf32>
    %c0_17 = arith.constant 0 : index
    %c0_18 = arith.constant 0 : index
    %20 = vector.load %arg6[%c0_17, %c0_18] : memref<1x8xf32, #tpu.memory_space<vmem>>, vector<1x8xf32>
    %21 = vector.shape_cast %20 : vector<1x8xf32> to vector<8xf32>
    %22 = vector.shape_cast %21 : vector<8xf32> to vector<1x1x1x8xf32>
    %23 = vector.broadcast %22 : vector<1x1x1x8xf32> to vector<2x4x8x8xf32>
    %24 = arith.addf %19, %23 : vector<2x4x8x8xf32>
    %cst_19 = arith.constant 0.000000e+00 : f32
    %25 = vector.broadcast %cst_19 : f32 to vector<2x1x8x8xf32>
    %26 = vector.extract_strided_slice %15 {offsets = [0, 0, 0, 0], sizes = [2, 3, 8, 8], strides = [1, 1, 1, 1]} : vector<2x4x8x8xf32> to vector<2x3x8x8xf32>
    %27 = tpu.concatenate %25, %26 in 1 : vector<2x1x8x8xf32>, vector<2x3x8x8xf32> -> vector<2x4x8x8xf32>
    %c0_20 = arith.constant 0 : index
    %c0_21 = arith.constant 0 : index
    %c0_22 = arith.constant 0 : index
    %28 = vector.load %arg5[%c0_20, %c0_21, %c0_22] : memref<3x3x8xf32, #tpu.memory_space<vmem>>, vector<1x1x8xf32>
    %29 = vector.shape_cast %28 : vector<1x1x8xf32> to vector<8xf32>
    %30 = vector.shape_cast %29 : vector<8xf32> to vector<1x1x1x8xf32>
    %31 = vector.broadcast %30 : vector<1x1x1x8xf32> to vector<2x4x8x8xf32>
    %32 = arith.mulf %27, %31 : vector<2x4x8x8xf32>
    %33 = arith.addf %24, %32 : vector<2x4x8x8xf32>
    %cst_23 = arith.constant 0.000000e+00 : f32
    %34 = vector.broadcast %cst_23 : f32 to vector<2x1x8x8xf32>
    %35 = vector.extract_strided_slice %12 {offsets = [0, 0, 0, 0], sizes = [2, 3, 8, 8], strides = [1, 1, 1, 1]} : vector<2x4x8x8xf32> to vector<2x3x8x8xf32>
    %36 = tpu.concatenate %34, %35 in 1 : vector<2x1x8x8xf32>, vector<2x3x8x8xf32> -> vector<2x4x8x8xf32>
    %c0_24 = arith.constant 0 : index
    %c1 = arith.constant 1 : index
    %c0_25 = arith.constant 0 : index
    %37 = vector.load %arg5[%c0_24, %c1, %c0_25] : memref<3x3x8xf32, #tpu.memory_space<vmem>>, vector<1x1x8xf32>
    %38 = vector.shape_cast %37 : vector<1x1x8xf32> to vector<8xf32>
    %39 = vector.shape_cast %38 : vector<8xf32> to vector<1x1x1x8xf32>
    %40 = vector.broadcast %39 : vector<1x1x1x8xf32> to vector<2x4x8x8xf32>
    %41 = arith.mulf %36, %40 : vector<2x4x8x8xf32>
    %42 = arith.addf %33, %41 : vector<2x4x8x8xf32>
    %cst_26 = arith.constant 0.000000e+00 : f32
    %43 = vector.broadcast %cst_26 : f32 to vector<2x1x8x8xf32>
    %44 = vector.extract_strided_slice %18 {offsets = [0, 0, 0, 0], sizes = [2, 3, 8, 8], strides = [1, 1, 1, 1]} : vector<2x4x8x8xf32> to vector<2x3x8x8xf32>
    %45 = tpu.concatenate %43, %44 in 1 : vector<2x1x8x8xf32>, vector<2x3x8x8xf32> -> vector<2x4x8x8xf32>
    %c0_27 = arith.constant 0 : index
    %c2 = arith.constant 2 : index
    %c0_28 = arith.constant 0 : index
    %46 = vector.load %arg5[%c0_27, %c2, %c0_28] : memref<3x3x8xf32, #tpu.memory_space<vmem>>, vector<1x1x8xf32>
    %47 = vector.shape_cast %46 : vector<1x1x8xf32> to vector<8xf32>
    %48 = vector.shape_cast %47 : vector<8xf32> to vector<1x1x1x8xf32>
    %49 = vector.broadcast %48 : vector<1x1x1x8xf32> to vector<2x4x8x8xf32>
    %50 = arith.mulf %45, %49 : vector<2x4x8x8xf32>
    %51 = arith.addf %42, %50 : vector<2x4x8x8xf32>
    %c1_29 = arith.constant 1 : index
    %c0_30 = arith.constant 0 : index
    %c0_31 = arith.constant 0 : index
    %52 = vector.load %arg5[%c1_29, %c0_30, %c0_31] : memref<3x3x8xf32, #tpu.memory_space<vmem>>, vector<1x1x8xf32>
    %53 = vector.shape_cast %52 : vector<1x1x8xf32> to vector<8xf32>
    %54 = vector.shape_cast %53 : vector<8xf32> to vector<1x1x1x8xf32>
    %55 = vector.broadcast %54 : vector<1x1x1x8xf32> to vector<2x4x8x8xf32>
    %56 = arith.mulf %15, %55 : vector<2x4x8x8xf32>
    %57 = arith.addf %51, %56 : vector<2x4x8x8xf32>
    %c1_32 = arith.constant 1 : index
    %c1_33 = arith.constant 1 : index
    %c0_34 = arith.constant 0 : index
    %58 = vector.load %arg5[%c1_32, %c1_33, %c0_34] : memref<3x3x8xf32, #tpu.memory_space<vmem>>, vector<1x1x8xf32>
    %59 = vector.shape_cast %58 : vector<1x1x8xf32> to vector<8xf32>
    %60 = vector.shape_cast %59 : vector<8xf32> to vector<1x1x1x8xf32>
    %61 = vector.broadcast %60 : vector<1x1x1x8xf32> to vector<2x4x8x8xf32>
    %62 = arith.mulf %12, %61 : vector<2x4x8x8xf32>
    %63 = arith.addf %57, %62 : vector<2x4x8x8xf32>
    %c1_35 = arith.constant 1 : index
    %c2_36 = arith.constant 2 : index
    %c0_37 = arith.constant 0 : index
    %64 = vector.load %arg5[%c1_35, %c2_36, %c0_37] : memref<3x3x8xf32, #tpu.memory_space<vmem>>, vector<1x1x8xf32>
    %65 = vector.shape_cast %64 : vector<1x1x8xf32> to vector<8xf32>
    %66 = vector.shape_cast %65 : vector<8xf32> to vector<1x1x1x8xf32>
    %67 = vector.broadcast %66 : vector<1x1x1x8xf32> to vector<2x4x8x8xf32>
    %68 = arith.mulf %18, %67 : vector<2x4x8x8xf32>
    %69 = arith.addf %63, %68 : vector<2x4x8x8xf32>
    %cst_38 = arith.constant 0.000000e+00 : f32
    %70 = vector.broadcast %cst_38 : f32 to vector<2x1x8x8xf32>
    %71 = vector.extract_strided_slice %15 {offsets = [0, 1, 0, 0], sizes = [2, 3, 8, 8], strides = [1, 1, 1, 1]} : vector<2x4x8x8xf32> to vector<2x3x8x8xf32>
    %72 = tpu.concatenate %71, %70 in 1 : vector<2x3x8x8xf32>, vector<2x1x8x8xf32> -> vector<2x4x8x8xf32>
    %c2_39 = arith.constant 2 : index
    %c0_40 = arith.constant 0 : index
    %c0_41 = arith.constant 0 : index
    %73 = vector.load %arg5[%c2_39, %c0_40, %c0_41] : memref<3x3x8xf32, #tpu.memory_space<vmem>>, vector<1x1x8xf32>
    %74 = vector.shape_cast %73 : vector<1x1x8xf32> to vector<8xf32>
    %75 = vector.shape_cast %74 : vector<8xf32> to vector<1x1x1x8xf32>
    %76 = vector.broadcast %75 : vector<1x1x1x8xf32> to vector<2x4x8x8xf32>
    %77 = arith.mulf %72, %76 : vector<2x4x8x8xf32>
    %78 = arith.addf %69, %77 : vector<2x4x8x8xf32>
    %cst_42 = arith.constant 0.000000e+00 : f32
    %79 = vector.broadcast %cst_42 : f32 to vector<2x1x8x8xf32>
    %80 = vector.extract_strided_slice %12 {offsets = [0, 1, 0, 0], sizes = [2, 3, 8, 8], strides = [1, 1, 1, 1]} : vector<2x4x8x8xf32> to vector<2x3x8x8xf32>
    %81 = tpu.concatenate %80, %79 in 1 : vector<2x3x8x8xf32>, vector<2x1x8x8xf32> -> vector<2x4x8x8xf32>
    %c2_43 = arith.constant 2 : index
    %c1_44 = arith.constant 1 : index
    %c0_45 = arith.constant 0 : index
    %82 = vector.load %arg5[%c2_43, %c1_44, %c0_45] : memref<3x3x8xf32, #tpu.memory_space<vmem>>, vector<1x1x8xf32>
    %83 = vector.shape_cast %82 : vector<1x1x8xf32> to vector<8xf32>
    %84 = vector.shape_cast %83 : vector<8xf32> to vector<1x1x1x8xf32>
    %85 = vector.broadcast %84 : vector<1x1x1x8xf32> to vector<2x4x8x8xf32>
    %86 = arith.mulf %81, %85 : vector<2x4x8x8xf32>
    %87 = arith.addf %78, %86 : vector<2x4x8x8xf32>
    %cst_46 = arith.constant 0.000000e+00 : f32
    %88 = vector.broadcast %cst_46 : f32 to vector<2x1x8x8xf32>
    %89 = vector.extract_strided_slice %18 {offsets = [0, 1, 0, 0], sizes = [2, 3, 8, 8], strides = [1, 1, 1, 1]} : vector<2x4x8x8xf32> to vector<2x3x8x8xf32>
    %90 = tpu.concatenate %89, %88 in 1 : vector<2x3x8x8xf32>, vector<2x1x8x8xf32> -> vector<2x4x8x8xf32>
    %c2_47 = arith.constant 2 : index
    %c2_48 = arith.constant 2 : index
    %c0_49 = arith.constant 0 : index
    %91 = vector.load %arg5[%c2_47, %c2_48, %c0_49] : memref<3x3x8xf32, #tpu.memory_space<vmem>>, vector<1x1x8xf32>
    %92 = vector.shape_cast %91 : vector<1x1x8xf32> to vector<8xf32>
    %93 = vector.shape_cast %92 : vector<8xf32> to vector<1x1x1x8xf32>
    %94 = vector.broadcast %93 : vector<1x1x1x8xf32> to vector<2x4x8x8xf32>
    %95 = arith.mulf %90, %94 : vector<2x4x8x8xf32>
    %96 = arith.addf %87, %95 : vector<2x4x8x8xf32>
    %97 = vector.extract_strided_slice %2 {offsets = [0, 0, 0], sizes = [2, 32, 4], strides = [1, 1, 1]} : vector<2x32x8xbf16> to vector<2x32x4xbf16>
    %98 = vector.extract_strided_slice %2 {offsets = [0, 0, 4], sizes = [2, 32, 4], strides = [1, 1, 1]} : vector<2x32x8xbf16> to vector<2x32x4xbf16>
    %99 = tpu.concatenate %97, %98 in 0 : vector<2x32x4xbf16>, vector<2x32x4xbf16> -> vector<4x32x4xbf16>
    %100 = vector.extract_strided_slice %5 {offsets = [0, 0, 0], sizes = [2, 32, 4], strides = [1, 1, 1]} : vector<2x32x8xbf16> to vector<2x32x4xbf16>
    %101 = vector.extract_strided_slice %5 {offsets = [0, 0, 4], sizes = [2, 32, 4], strides = [1, 1, 1]} : vector<2x32x8xbf16> to vector<2x32x4xbf16>
    %102 = tpu.concatenate %100, %101 in 0 : vector<2x32x4xbf16>, vector<2x32x4xbf16> -> vector<4x32x4xbf16>
    %103 = vector.extract_strided_slice %8 {offsets = [0, 0, 0], sizes = [2, 32, 4], strides = [1, 1, 1]} : vector<2x32x8xbf16> to vector<2x32x4xbf16>
    %104 = vector.extract_strided_slice %8 {offsets = [0, 0, 4], sizes = [2, 32, 4], strides = [1, 1, 1]} : vector<2x32x8xbf16> to vector<2x32x4xbf16>
    %105 = tpu.concatenate %103, %104 in 0 : vector<2x32x4xbf16>, vector<2x32x4xbf16> -> vector<4x32x4xbf16>
    %cst_50 = arith.constant dense<0.000000e+00> : vector<4x32x32xf32>
    %106 = tpu.matmul %99, %102, %cst_50 {dimension_numbers = #tpu.dot_dimension_numbers<[2], [2], [1], [1], [0, 0, 0, 1, 1, 1], [0], [0]>} : vector<4x32x4xbf16>, vector<4x32x4xbf16>, vector<4x32x32xf32> -> vector<4x32x32xf32>
    %cst_51 = arith.constant dense<0xFF800000> : vector<4x32xf32>
    %107 = vector.multi_reduction <maximumf>, %106, %cst_51 [2] : vector<4x32x32xf32> to vector<4x32xf32>
    %108 = vector.shape_cast %107 : vector<4x32xf32> to vector<4x32x1xf32>
    %109 = vector.broadcast %108 : vector<4x32x1xf32> to vector<4x32x32xf32>
    %110 = arith.subf %106, %109 : vector<4x32x32xf32>
    %111 = math.exp %110 : vector<4x32x32xf32>
    %cst_52 = arith.constant dense<0.000000e+00> : vector<4x32xf32>
    %112 = vector.multi_reduction <add>, %111, %cst_52 [2] : vector<4x32x32xf32> to vector<4x32xf32>
    %113 = vector.shape_cast %112 : vector<4x32xf32> to vector<4x32x1xf32>
    %114 = tpu.reciprocal %113 {approx = true} : vector<4x32x1xf32> -> vector<4x32x1xf32>
    %115 = arith.truncf %111 : vector<4x32x32xf32> to vector<4x32x32xbf16>
    %cst_53 = arith.constant dense<0.000000e+00> : vector<4x32x4xf32>
    %116 = tpu.matmul %115, %105, %cst_53 {dimension_numbers = #tpu.dot_dimension_numbers<[2], [1], [1], [2], [0, 0, 0, 1, 1, 2], [0], [0]>} : vector<4x32x32xbf16>, vector<4x32x4xbf16>, vector<4x32x4xf32> -> vector<4x32x4xf32>
    %117 = vector.broadcast %114 : vector<4x32x1xf32> to vector<4x32x4xf32>
    %118 = arith.mulf %116, %117 : vector<4x32x4xf32>
    %119 = vector.extract_strided_slice %118 {offsets = [0, 0, 0], sizes = [2, 32, 4], strides = [1, 1, 1]} : vector<4x32x4xf32> to vector<2x32x4xf32>
    %120 = vector.extract_strided_slice %118 {offsets = [2, 0, 0], sizes = [2, 32, 4], strides = [1, 1, 1]} : vector<4x32x4xf32> to vector<2x32x4xf32>
    %121 = tpu.concatenate %119, %120 in 2 : vector<2x32x4xf32>, vector<2x32x4xf32> -> vector<2x32x8xf32>
    %122 = vector.shape_cast %121 : vector<2x32x8xf32> to vector<2x4x8x8xf32>
    %123 = arith.addf %122, %96 : vector<2x4x8x8xf32>
    %124 = vector.shape_cast %123 : vector<2x4x8x8xf32> to vector<1x8x8x8xf32>
    %125 = arith.truncf %124 : vector<1x8x8x8xf32> to vector<1x8x8x8xbf16>
    %c0_54 = arith.constant 0 : index
    %c0_55 = arith.constant 0 : index
    %c0_56 = arith.constant 0 : index
    %c0_57 = arith.constant 0 : index
    %126 = vector.load %arg7[%c0_54, %c0_55, %c0_56, %c0_57] : memref<1x8x8x8xbf16, #tpu.memory_space<vmem>>, vector<1x8x8x8xbf16>
    tpu.vector_store %arg7[%c0_54, %c0_55, %c0_56, %c0_57], %125 {strides = array<i32>} : memref<1x8x8x8xbf16, #tpu.memory_space<vmem>>, vector<1x8x8x8xbf16>,
    return
  }
  func.func @transform_0(%arg0: i32, %arg1: i32) -> (i32, i32, i32, i32) {
    %c0_i32 = arith.constant 0 : i32
    %c0_i32_0 = arith.constant 0 : i32
    %c0_i32_1 = arith.constant 0 : i32
    return %arg0, %arg1, %c0_i32, %c0_i32_0 : i32, i32, i32, i32
  }
  func.func @transform_1(%arg0: i32, %arg1: i32) -> (i32, i32, i32, i32) {
    %c0_i32 = arith.constant 0 : i32
    %c0_i32_0 = arith.constant 0 : i32
    %c0_i32_1 = arith.constant 0 : i32
    return %arg0, %arg1, %c0_i32, %c0_i32_0 : i32, i32, i32, i32
  }
  func.func @transform_2(%arg0: i32, %arg1: i32) -> (i32, i32, i32, i32) {
    %c0_i32 = arith.constant 0 : i32
    %c0_i32_0 = arith.constant 0 : i32
    %c0_i32_1 = arith.constant 0 : i32
    return %arg0, %arg1, %c0_i32, %c0_i32_0 : i32, i32, i32, i32
  }
  func.func @transform_3(%arg0: i32, %arg1: i32) -> (i32, i32, i32) {
    %c0_i32 = arith.constant 0 : i32
    %c0_i32_0 = arith.constant 0 : i32
    %c0_i32_1 = arith.constant 0 : i32
    %c0_i32_2 = arith.constant 0 : i32
    return %c0_i32, %c0_i32_0, %c0_i32_1 : i32, i32, i32
  }
  func.func @transform_4(%arg0: i32, %arg1: i32) -> (i32, i32) {
    %c0_i32 = arith.constant 0 : i32
    %c0_i32_0 = arith.constant 0 : i32
    %c0_i32_1 = arith.constant 0 : i32
    return %c0_i32, %c0_i32_0 : i32, i32
  }
  func.func @transform_5(%arg0: i32, %arg1: i32) -> (i32, i32, i32, i32) {
    %c0_i32 = arith.constant 0 : i32
    %c0_i32_0 = arith.constant 0 : i32
    %c0_i32_1 = arith.constant 0 : i32
    return %arg0, %arg1, %c0_i32, %c0_i32_0 : i32, i32, i32, i32
  }
}

module attributes {stable_mosaic.version = 11 : i64} {
  func.func @_fused_proj_kernel(%arg0: i32, %arg1: memref<64x8xbf16, #tpu.memory_space<vmem>>, %arg2: memref<64x8xbf16, #tpu.memory_space<vmem>>, %arg3: memref<8x16xbf16, #tpu.memory_space<vmem>>, %arg4: memref<8x16xbf16, #tpu.memory_space<vmem>>, %arg5: memref<1x16xf32, #tpu.memory_space<vmem>>, %arg6: memref<64x16xf32, #tpu.memory_space<vmem>>) attributes {dimension_semantics = [#tpu.dimension_semantics<parallel>], iteration_bounds = array<i64: 2>, scalar_prefetch = 0 : i64, scratch_operands = 0 : i64, tpu.core_type = #tpu.core_type<tc>, window_params = [{transform_indices = @transform_0, window_bounds = array<i64: 64, 8>}, {transform_indices = @transform_1, window_bounds = array<i64: 64, 8>}, {pipeline_mode = #tpu.pipeline_mode<synchronous>, transform_indices = @transform_2, window_bounds = array<i64: 8, 16>}, {pipeline_mode = #tpu.pipeline_mode<synchronous>, transform_indices = @transform_3, window_bounds = array<i64: 8, 16>}, {pipeline_mode = #tpu.pipeline_mode<synchronous>, transform_indices = @transform_4, window_bounds = array<i64: 1, 16>}, {transform_indices = @transform_5, window_bounds = array<i64: 64, 16>}]} {
    %c0 = arith.constant 0 : index
    %c0_0 = arith.constant 0 : index
    %0 = vector.load %arg1[%c0, %c0_0] : memref<64x8xbf16, #tpu.memory_space<vmem>>, vector<64x8xbf16>
    %c0_1 = arith.constant 0 : index
    %c0_2 = arith.constant 0 : index
    %1 = vector.load %arg3[%c0_1, %c0_2] : memref<8x16xbf16, #tpu.memory_space<vmem>>, vector<8x16xbf16>
    %cst = arith.constant dense<0.000000e+00> : vector<64x16xf32>
    %2 = tpu.matmul %0, %1, %cst {dimension_numbers = #tpu.dot_dimension_numbers<[1], [0], [0], [1], [0, 0, 1, 1], [], []>} : vector<64x8xbf16>, vector<8x16xbf16>, vector<64x16xf32> -> vector<64x16xf32>
    %c0_3 = arith.constant 0 : index
    %c0_4 = arith.constant 0 : index
    %3 = vector.load %arg2[%c0_3, %c0_4] : memref<64x8xbf16, #tpu.memory_space<vmem>>, vector<64x8xbf16>
    %c0_5 = arith.constant 0 : index
    %c0_6 = arith.constant 0 : index
    %4 = vector.load %arg4[%c0_5, %c0_6] : memref<8x16xbf16, #tpu.memory_space<vmem>>, vector<8x16xbf16>
    %cst_7 = arith.constant dense<0.000000e+00> : vector<64x16xf32>
    %5 = tpu.matmul %3, %4, %cst_7 {dimension_numbers = #tpu.dot_dimension_numbers<[1], [0], [0], [1], [0, 0, 1, 1], [], []>} : vector<64x8xbf16>, vector<8x16xbf16>, vector<64x16xf32> -> vector<64x16xf32>
    %6 = arith.addf %2, %5 : vector<64x16xf32>
    %c0_8 = arith.constant 0 : index
    %c0_9 = arith.constant 0 : index
    %7 = vector.load %arg5[%c0_8, %c0_9] : memref<1x16xf32, #tpu.memory_space<vmem>>, vector<1x16xf32>
    %8 = vector.broadcast %7 : vector<1x16xf32> to vector<64x16xf32>
    %9 = arith.addf %6, %8 : vector<64x16xf32>
    %c0_10 = arith.constant 0 : index
    %c0_11 = arith.constant 0 : index
    %10 = vector.load %arg6[%c0_10, %c0_11] : memref<64x16xf32, #tpu.memory_space<vmem>>, vector<64x16xf32>
    tpu.vector_store %arg6[%c0_10, %c0_11], %9 {strides = array<i32>} : memref<64x16xf32, #tpu.memory_space<vmem>>, vector<64x16xf32>,
    return
  }
  func.func @transform_0(%arg0: i32) -> (i32, i32) {
    %c0_i32 = arith.constant 0 : i32
    %c0_i32_0 = arith.constant 0 : i32
    return %arg0, %c0_i32 : i32, i32
  }
  func.func @transform_1(%arg0: i32) -> (i32, i32) {
    %c0_i32 = arith.constant 0 : i32
    %c0_i32_0 = arith.constant 0 : i32
    return %arg0, %c0_i32 : i32, i32
  }
  func.func @transform_2(%arg0: i32) -> (i32, i32) {
    %c0_i32 = arith.constant 0 : i32
    %c0_i32_0 = arith.constant 0 : i32
    %c0_i32_1 = arith.constant 0 : i32
    return %c0_i32, %c0_i32_0 : i32, i32
  }
  func.func @transform_3(%arg0: i32) -> (i32, i32) {
    %c0_i32 = arith.constant 0 : i32
    %c0_i32_0 = arith.constant 0 : i32
    %c0_i32_1 = arith.constant 0 : i32
    return %c0_i32, %c0_i32_0 : i32, i32
  }
  func.func @transform_4(%arg0: i32) -> (i32, i32) {
    %c0_i32 = arith.constant 0 : i32
    %c0_i32_0 = arith.constant 0 : i32
    %c0_i32_1 = arith.constant 0 : i32
    return %c0_i32, %c0_i32_0 : i32, i32
  }
  func.func @transform_5(%arg0: i32) -> (i32, i32) {
    %c0_i32 = arith.constant 0 : i32
    %c0_i32_0 = arith.constant 0 : i32
    return %arg0, %c0_i32 : i32, i32
  }
}

</mosaic_0001>

<llo_original>
// kernel: cross_window_attention.4
$region0: #{cross_window_attention.4}
  #allocation0 [shape = 'u32[]', space=smem, size = 0x4, offset = 0x4, fixed_abs, tag = 'smem constant byte address 0x4 - core index']
  #allocation1 [shape = 'u32[144,128]{1,0:T(1,128)}', space=vmem, size = 0x12000, scoped, tag = 'internal scratch']
  %s0 = inlined_call_operand.vmem [shape: f32[128,16], index: 0, kind: input, shape index: {}]
  %s1 = inlined_call_operand.vmem [shape: bf16[16,48], index: 1, kind: input, shape index: {}]
  %s2 = inlined_call_operand.vmem [shape: f32[1,48], index: 2, kind: input, shape index: {}]
  %s3 = inlined_call_operand.vmem [shape: bf16[128,48], index: 3, kind: output, shape index: {}]
  %s4 = sld [smem:[#allocation0]]
  $region45: #{cross_window_attention.4} parent=0
    _
  %s6 = ssub.s32 1, %s4
  %s7 = scalar_select 0, %s6, %s4
  loop: start=0, step=1, limit=4
  $region2: #{cross_window_attention.4} parent=0 // loop_pre_header
    _
  $region3: #{cross_window_attention.4} parent=0 // loop_header
    %s9 = sphi 0, %s13
    %p10 = scmp.ge.s32.totalorder %s9, 4
    %s19 = sphi 0, %s21
    %s22 = sphi 0, %s19
    %s23 = sphi 0, %s22
    %s39 = sphi 0, %s23
    %s43 = sphi 0, %s43
    %s45 = sphi 0, %s43
    %s46 = sphi 0, %s45
    %s60 = sphi 0, %s46
    %s64 = sphi 0, %s64
    %s66 = sphi 0, %s64
    %s67 = sphi 0, %s66
    %s81 = sphi 0, %s67
    %s87 = sphi 0, %s89
    %s90 = sphi 0, %s87
    %s91 = sphi 0, %s90
    %s107 = sphi 0, %s91
  $region4: #{cross_window_attention.4} parent=0 // loop_header_branch
    %12 = sbr.rel (%p10) target = $region8
  $region5: #{cross_window_attention.4} parent=0 // loop_body
    %s14 = ssub.s32 %s9, 1
    %s15 = ssub.s32 %s9, 2
    %s16 = sadd.s32 %s9, 1
    %s17 = ssub.s32 %s9, %s16
    %p18 = scmp.eq.s32.totalorder %s17, 0
    %s20 = sadd.s32 %s19, 1
    %s21 = scalar_select %p18, %s19, %s20
    %p24 = pneg %p18
    %p25 = scmp.eq.s32.totalorder %s9, 1
    %p26 = por %p24, %p25
    %p27 = scmp.ne.s32.totalorder %s19, %s22
    %p28 = scmp.eq.s32.totalorder %s9, 0
    %p29 = por %p27, %p28
    %p30 = scmp.ne.s32.totalorder %s19, %s22
    %p31 = scmp.eq.s32.totalorder %s14, 1
    %p32 = por %p30, %p31
    %p33 = scmp.ne.s32.totalorder %s22, %s23
    %p34 = scmp.eq.s32.totalorder %s14, 0
    %p35 = por %p33, %p34
    %p36 = scmp.ne.s32.totalorder %s22, %s23
    %p37 = scmp.eq.s32.totalorder %s15, 1
    %p38 = por %p36, %p37
    %p40 = scmp.ne.s32.totalorder %s23, %s39
    %p41 = scmp.eq.s32.totalorder %s15, 0
    %p42 = por %p40, %p41
    %s44 = sadd.s32 %s43, 1
    %p47 = scmp.eq.s32.totalorder %s9, 1
    %p48 = scmp.ne.s32.totalorder %s43, %s45
    %p49 = scmp.eq.s32.totalorder %s9, 0
    %p50 = por %p48, %p49
    %p51 = scmp.ne.s32.totalorder %s43, %s45
    %p52 = scmp.eq.s32.totalorder %s14, 1
    %p53 = por %p51, %p52
    %p54 = scmp.ne.s32.totalorder %s45, %s46
    %p55 = scmp.eq.s32.totalorder %s14, 0
    %p56 = por %p54, %p55
    %p57 = scmp.ne.s32.totalorder %s45, %s46
    %p58 = scmp.eq.s32.totalorder %s15, 1
    %p59 = por %p57, %p58
    %p61 = scmp.ne.s32.totalorder %s46, %s60
    %p62 = scmp.eq.s32.totalorder %s15, 0
    %p63 = por %p61, %p62
    %s65 = sadd.s32 %s64, 1
    %p68 = scmp.eq.s32.totalorder %s9, 1
    %p69 = scmp.ne.s32.totalorder %s64, %s66
    %p70 = scmp.eq.s32.totalorder %s9, 0
    %p71 = por %p69, %p70
    %p72 = scmp.ne.s32.totalorder %s64, %s66
    %p73 = scmp.eq.s32.totalorder %s14, 1
    %p74 = por %p72, %p73
    %p75 = scmp.ne.s32.totalorder %s66, %s67
    %p76 = scmp.eq.s32.totalorder %s14, 0
    %p77 = por %p75, %p76
    %p78 = scmp.ne.s32.totalorder %s66, %s67
    %p79 = scmp.eq.s32.totalorder %s15, 1
    %p80 = por %p78, %p79
    %p82 = scmp.ne.s32.totalorder %s67, %s81
    %p83 = scmp.eq.s32.totalorder %s15, 0
    %p84 = por %p82, %p83
    %s85 = ssub.s32 %s9, %s16
    %p86 = scmp.eq.s32.totalorder %s85, 0
    %s88 = sadd.s32 %s87, 1
    %s89 = scalar_select %p86, %s87, %s88
    %p92 = pneg %p86
    %p93 = scmp.eq.s32.totalorder %s9, 1
    %p94 = por %p92, %p93
    %p95 = scmp.ne.s32.totalorder %s87, %s90
    %p96 = scmp.eq.s32.totalorder %s9, 0
    %p97 = por %p95, %p96
    %p98 = scmp.ne.s32.totalorder %s87, %s90
    %p99 = scmp.eq.s32.totalorder %s14, 1
    %p100 = por %p98, %p99
    %p101 = scmp.ne.s32.totalorder %s90, %s91
    %p102 = scmp.eq.s32.totalorder %s14, 0
    %p103 = por %p101, %p102
    %p104 = scmp.ne.s32.totalorder %s90, %s91
    %p105 = scmp.eq.s32.totalorder %s15, 1
    %p106 = por %p104, %p105
    %p108 = scmp.ne.s32.totalorder %s91, %s107
    %p109 = scmp.eq.s32.totalorder %s15, 0
    %p110 = por %p108, %p109
    %p111 = scmp.le.s32.totalorder 1, %s9
    %p112 = scmp.lt.s32.totalorder %s9, 3
    %p113 = pnand %p111, %p112
    %p114 = pneg %p113
    // Predicated region
    $region9: #{cross_window_attention.4} parent=5 // pred_check
      _
    $region10: #{cross_window_attention.4} parent=5 // pred_check_branch
      %116 = sbr.rel (%p113) target = $region12
    $region11: #{cross_window_attention.4} parent=5 // pred_region
      %s117 = ssub.s32 %s9, 1
      // Predicated region
      $region13: #{cross_window_attention.4} parent=11 // pred_check
        %p118 = pneg %p56
      $region14: #{cross_window_attention.4} parent=11 // pred_check_branch
        %120 = sbr.rel (%p118) target = $region16
      $region15: #{cross_window_attention.4} parent=11 // pred_region
        _
      $region16: #{cross_window_attention.4} parent=11 // pred_fallthru
        _
      // Predicated region
      $region17: #{cross_window_attention.4} parent=11 // pred_check
        %p121 = pneg %p77
      $region18: #{cross_window_attention.4} parent=11 // pred_check_branch
        %123 = sbr.rel (%p121) target = $region20
      $region19: #{cross_window_attention.4} parent=11 // pred_region
        _
      $region20: #{cross_window_attention.4} parent=11 // pred_fallthru
        _
    $region12: #{cross_window_attention.4} parent=5 // pred_fallthru
      _
    %p124 = scmp.lt.s32.totalorder %s9, 2
    // Predicated region
    $region21: #{cross_window_attention.4} parent=5 // pred_check
      %p125 = pneg %p124
    $region22: #{cross_window_attention.4} parent=5 // pred_check_branch
      %127 = sbr.rel (%p125) target = $region24
    $region23: #{cross_window_attention.4} parent=5 // pred_region
      // Predicated region
      $region25: #{cross_window_attention.4} parent=23 // pred_check
        %p128 = pneg %p29
      $region26: #{cross_window_attention.4} parent=23 // pred_check_branch
        %130 = sbr.rel (%p128) target = $region28
      $region27: #{cross_window_attention.4} parent=23 // pred_region
        %s131 = smul.u32 8, %s9
        %p132 = scmp.lt.s32.totalorder %s131, 15
        %s133 = scalar_select %p132, %s131, 15
        %s134 = smul.addr %s133, 8
        %s135 = scalar_lea.vmem %s0, %s134
        %s136 = smul.u32 8, %s9
      $region28: #{cross_window_attention.4} parent=23 // pred_fallthru
        _
    $region24: #{cross_window_attention.4} parent=5 // pred_fallthru
      _
    %p137 = scmp.le.s32.totalorder 1, %s9
    %p138 = scmp.lt.s32.totalorder %s9, 3
    %p139 = pnand %p137, %p138
    %p140 = pneg %p139
    // Predicated region
    $region29: #{cross_window_attention.4} parent=5 // pred_check
      _
    $region30: #{cross_window_attention.4} parent=5 // pred_check_branch
      %142 = sbr.rel (%p139) target = $region32
    $region31: #{cross_window_attention.4} parent=5 // pred_region
      %s143 = ssub.s32 %s9, 1
      %s144 = smul.u32 8, %s14
      %p145 = scmp.lt.s32.totalorder %s144, 15
      %s146 = scalar_select %p145, %s144, 15
      %s147 = smul.addr %s146, 8
      %s148 = scalar_lea.vmem %s0, %s147
      %p149 = pneg %p35
      %p150 = pneg %p32
      %p151 = pneg %p56
      %p152 = pneg %p53
      %p153 = pneg %p77
      %p154 = pneg %p74
      %p155 = pneg %p103
      %p156 = pneg %p100
      %s157 = smul.u32 8, %s14
      %p158 = scmp.lt.s32.totalorder %s157, 15
      %s159 = scalar_select %p158, %s157, 15
      %s160 = smul.addr %s159, 4
      %s161 = scalar_lea.vmem %s3, %s160
      %s162 = smul.u32 8, %s14
      %p163 = scmp.lt.s32.totalorder %s162, 15
      %s164 = scalar_select %p163, %s162, 15
      %s165 = smul.addr %s164, 8
      %s166 = scalar_lea.vmem %s0, %s165
      %s167 = smul.u32 8, %s14
      %s168 = smul.u32 8, %s14
      %p169 = scmp.lt.s32.totalorder %s168, 15
      %s170 = scalar_select %p169, %s168, 15
      %s171 = smul.addr %s170, 4
      %s172 = scalar_lea.vmem %s3, %s171
      %s173 = smul.u32 8, %s14
      %v175 = vld [vmem:[%s166] sm:$0xff]
      %v176 = vld [vmem:[%s166 + $0x8] sm:$0xff]
      %v177 = vld [vmem:[%s166 + $0x10] sm:$0xff]
      %v178 = vld [vmem:[%s166 + $0x18] sm:$0xff]
      %v179 = vld [vmem:[%s166 + $0x20] sm:$0xff]
      %v180 = vld [vmem:[%s166 + $0x28] sm:$0xff]
      %v181 = vld [vmem:[%s166 + $0x30] sm:$0xff]
      %v182 = vld [vmem:[%s166 + $0x38] sm:$0xff]
      %v183 = vpack.c.bf16 %v176, %v175
      %v184 = vpack.c.bf16 %v178, %v177
      %v185 = vpack.c.bf16 %v180, %v179
      %v186 = vpack.c.bf16 %v182, %v181
      %v187 = vld [vmem:[%s1] sm:$0xf]
      %v188 = vld [vmem:[%s1 + $0x4] sm:$0xf]
      %v189 = vld [vmem:[%s2] sm:$0x1]
      %v191 = vlaneseq
      %v192 = vshrl.u32 %v191, 7
      %v193 = vsub.s32 0, %v192
      %v194 = vrot.slane %v189, %v193
      %v198 = vunpack.c.l.b16 %v187
      %v199 = vunpack.c.l.b16 %v188
      %v200 = vpack.c.b16 %v199, %v198
      %vm202 = vcmask 130048
      %v204 = vsel %vm202, %v183, 0
      %v207 = vsel %vm202, %v184, 0
      %v210 = vsel %vm202, %v185, 0
      %v213 = vsel %vm202, %v186, 0
      %215 = vmatprep.subr.bf16.mxu0 0
      %216 = vmatpush1.bf16.msra.mxu0 %v200
      %217 = vmatprep.subr.bf16.mxu0 0
      %218 = vmatpush1.bf16.msra.mxu0 0
      %219 = vmatprep.subr.bf16.mxu0 0
      %220 = vmatpush1.bf16.msra.mxu0 0
      %221 = vmatprep.subr.bf16.mxu0 0
      %222 = vmatpush1.bf16.msra.mxu0 0
      %223 = vmatprep.subr.bf16.mxu0 0
      %224 = vmatpush1.bf16.msra.mxu0 0
      %225 = vmatprep.subr.bf16.mxu0 0
      %226 = vmatpush1.bf16.msra.mxu0 0
      %227 = vmatprep.subr.bf16.mxu0 0
      %228 = vmatpush1.bf16.msra.mxu0 0
      %229 = vmatprep.subr.bf16.mxu0 0
      %230 = vmatpush1.bf16.msra.mxu0 0
      %231 = vmatprep.subr.bf16.mxu0 0
      %232 = vmatpush1.bf16.msra.mxu0 0
      %233 = vmatprep.subr.bf16.mxu0 0
      %234 = vmatpush1.bf16.msra.mxu0 0
      %235 = vmatprep.subr.bf16.mxu0 0
      %236 = vmatpush1.bf16.msra.mxu0 0
      %237 = vmatprep.subr.bf16.mxu0 0
      %238 = vmatpush1.bf16.msra.mxu0 0
      %239 = vmatprep.subr.bf16.mxu0 0
      %240 = vmatpush1.bf16.msra.mxu0 0
      %241 = vmatprep.subr.bf16.mxu0 0
      %242 = vmatpush1.bf16.msra.mxu0 0
      %243 = vmatprep.subr.bf16.mxu0 0
      %244 = vmatpush1.bf16.msra.mxu0 0
      %245 = vmatprep.subr.bf16.mxu0 0
      %246 = vmatpush1.bf16.msra.mxu0 0
      %247 = vmatprep.mubr.bf16.mxu0 0
      %248 = vmatmul.mubr.bf16.gmra.mrb[0].mxu0 %v204
      %v249 = vpop.f32.mrb[0].mxu0
      %v250 = vadd.f32 %v194, %v249
      %v251 = vpop.f32.mrb[0].mxu0
      %v252 = vpop.f32.mrb[0].mxu0
      %v253 = vadd.f32 %v194, %v252
      %v254 = vpop.f32.mrb[0].mxu0
      %255 = vmatprep.mubr.bf16.mxu0 0
      %256 = vmatmul.mubr.bf16.gmra.mrb[0].mxu0 %v207
      %v257 = vpop.f32.mrb[0].mxu0
      %v258 = vadd.f32 %v194, %v257
      %v259 = vpop.f32.mrb[0].mxu0
      %v260 = vpop.f32.mrb[0].mxu0
      %v261 = vadd.f32 %v194, %v260
      %v262 = vpop.f32.mrb[0].mxu0
      %263 = vmatprep.mubr.bf16.mxu0 0
      %264 = vmatmul.mubr.bf16.gmra.mrb[0].mxu0 %v210
      %v265 = vpop.f32.mrb[0].mxu0
      %v266 = vadd.f32 %v194, %v265
      %v267 = vpop.f32.mrb[0].mxu0
      %v268 = vpop.f32.mrb[0].mxu0
      %v269 = vadd.f32 %v194, %v268
      %v270 = vpop.f32.mrb[0].mxu0
      %271 = vmatprep.mubr.bf16.mxu0 0
      %272 = vmatmul.mubr.bf16.gmra.mrb[0].mxu0 %v213
      %v273 = vpop.f32.mrb[0].mxu0
      %v274 = vadd.f32 %v194, %v273
      %v275 = vpop.f32.mrb[0].mxu0
      %v276 = vpop.f32.mrb[0].mxu0
      %v277 = vadd.f32 %v194, %v276
      %v278 = vpop.f32.mrb[0].mxu0
      %279 = vdwg.mxu0
      %v280 = vpack.c.bf16 %v253, %v250
      %v281 = vpack.c.bf16 %v261, %v258
      %v282 = vpack.c.bf16 %v269, %v266
      %v283 = vpack.c.bf16 %v277, %v274
      %v288 = vunpack.c.l.b16 %v280
      %v289 = vunpack.c.h.b16 %v280
      %v290 = vunpack.c.l.b16 %v281
      %v291 = vunpack.c.h.b16 %v281
      %v292 = vunpack.c.l.b16 %v282
      %v293 = vunpack.c.h.b16 %v282
      %v294 = vunpack.c.l.b16 %v283
      %v295 = vunpack.c.h.b16 %v283
      %v296 = vpack.c.b16 %v288, %v288
      %v297 = vpack.c.b16 %v289, %v289
      %v298 = vpack.c.b16 %v290, %v290
      %v299 = vpack.c.b16 %v291, %v291
      %v300 = vpack.c.b16 %v292, %v292
      %v301 = vpack.c.b16 %v293, %v293
      %v302 = vpack.c.b16 %v294, %v294
      %v303 = vpack.c.b16 %v295, %v295
      %vm312 = vcmask 388096
      %313 = vst.msk [vmem:[%s172] sm:$0xf] %vm312, %v296
      %314 = vst.msk [vmem:[%s172 + $0x4] sm:$0xf] %vm312, %v297
      %315 = vst.msk [vmem:[%s172 + $0x8] sm:$0xf] %vm312, %v298
      %316 = vst.msk [vmem:[%s172 + $0xc] sm:$0xf] %vm312, %v299
      %317 = vst.msk [vmem:[%s172 + $0x10] sm:$0xf] %vm312, %v300
      %318 = vst.msk [vmem:[%s172 + $0x14] sm:$0xf] %vm312, %v301
      %319 = vst.msk [vmem:[%s172 + $0x18] sm:$0xf] %vm312, %v302
      %320 = vst.msk [vmem:[%s172 + $0x1c] sm:$0xf] %vm312, %v303
      %s321 = smul.u32 8, %s14
      %p322 = scmp.lt.s32.totalorder %s321, 15
      %s323 = scalar_select %p322, %s321, 15
      %s324 = smul.addr %s323, 4
      %s325 = scalar_lea.vmem %s3, %s324
      // Predicated region
      $region33: #{cross_window_attention.4} parent=31 // pred_check
        %p326 = pneg %p100
      $region34: #{cross_window_attention.4} parent=31 // pred_check_branch
        %328 = sbr.rel (%p326) target = $region36
      $region35: #{cross_window_attention.4} parent=31 // pred_region
        %s329 = smul.u32 8, %s14
      $region36: #{cross_window_attention.4} parent=31 // pred_fallthru
        _
    $region32: #{cross_window_attention.4} parent=5 // pred_fallthru
      _
    %p330 = scmp.le.s32.totalorder 2, %s9
    // Predicated region
    $region37: #{cross_window_attention.4} parent=5 // pred_check
      %p331 = pneg %p330
    $region38: #{cross_window_attention.4} parent=5 // pred_check_branch
      %333 = sbr.rel (%p331) target = $region40
    $region39: #{cross_window_attention.4} parent=5 // pred_region
      %s334 = ssub.s32 %s9, 2
      // Predicated region
      $region41: #{cross_window_attention.4} parent=39 // pred_check
        %p335 = pneg %p106
      $region42: #{cross_window_attention.4} parent=39 // pred_check_branch
        %337 = sbr.rel (%p335) target = $region44
      $region43: #{cross_window_attention.4} parent=39 // pred_region
        %s338 = smul.u32 8, %s15
        %p339 = scmp.lt.s32.totalorder %s338, 15
        %s340 = scalar_select %p339, %s338, 15
        %s341 = smul.addr %s340, 4
        %s342 = scalar_lea.vmem %s3, %s341
      $region44: #{cross_window_attention.4} parent=39 // pred_fallthru
        _
    $region40: #{cross_window_attention.4} parent=5 // pred_fallthru
      _
  $region6: #{cross_window_attention.4} parent=0 // loop_footer
    %s13 = sadd.s32 1, %s9
  $region7: #{cross_window_attention.4} parent=0 // loop_footer_branch
    %8 = sbr.rel target = $region3
  $region8: #{cross_window_attention.4} parent=0 // loop_exit
    _

// kernel: cross_window_attention.7
$region0: #{cross_window_attention.7}
  #allocation0 [shape = 'u32[]', space=smem, size = 0x4, offset = 0x4, fixed_abs, tag = 'smem constant byte address 0x4 - core index']
  #allocation1 [shape = 'u32[144,128]{1,0:T(1,128)}', space=vmem, size = 0x12000, scoped, tag = 'internal scratch']
  %s0 = inlined_call_operand.vmem [shape: bf16[128,8], index: 0, kind: input, shape index: {}]
  %s1 = inlined_call_operand.vmem [shape: bf16[128,8], index: 1, kind: input, shape index: {}]
  %s2 = inlined_call_operand.vmem [shape: bf16[8,16], index: 2, kind: input, shape index: {}]
  %s3 = inlined_call_operand.vmem [shape: bf16[8,16], index: 3, kind: input, shape index: {}]
  %s4 = inlined_call_operand.vmem [shape: f32[1,16], index: 4, kind: input, shape index: {}]
  %s5 = inlined_call_operand.vmem [shape: f32[128,16], index: 5, kind: output, shape index: {}]
  %s6 = sld [smem:[#allocation0]]
  $region53: #{cross_window_attention.7} parent=0
    _
  %s8 = ssub.s32 1, %s6
  %s9 = scalar_select 0, %s8, %s6
  loop: start=0, step=1, limit=4
  $region2: #{cross_window_attention.7} parent=0 // loop_pre_header
    _
  $region3: #{cross_window_attention.7} parent=0 // loop_header
    %s11 = sphi 0, %s15
    %p12 = scmp.ge.s32.totalorder %s11, 4
    %s21 = sphi 0, %s23
    %s24 = sphi 0, %s21
    %s25 = sphi 0, %s24
    %s41 = sphi 0, %s25
    %s47 = sphi 0, %s49
    %s50 = sphi 0, %s47
    %s51 = sphi 0, %s50
    %s67 = sphi 0, %s51
    %s71 = sphi 0, %s71
    %s73 = sphi 0, %s71
    %s74 = sphi 0, %s73
    %s88 = sphi 0, %s74
    %s92 = sphi 0, %s92
    %s94 = sphi 0, %s92
    %s95 = sphi 0, %s94
    %s109 = sphi 0, %s95
    %s113 = sphi 0, %s113
    %s115 = sphi 0, %s113
    %s116 = sphi 0, %s115
    %s130 = sphi 0, %s116
    %s136 = sphi 0, %s138
    %s139 = sphi 0, %s136
    %s140 = sphi 0, %s139
    %s156 = sphi 0, %s140
  $region4: #{cross_window_attention.7} parent=0 // loop_header_branch
    %14 = sbr.rel (%p12) target = $region8
  $region5: #{cross_window_attention.7} parent=0 // loop_body
    %s16 = ssub.s32 %s11, 1
    %s17 = ssub.s32 %s11, 2
    %s18 = sadd.s32 %s11, 1
    %s19 = ssub.s32 %s11, %s18
    %p20 = scmp.eq.s32.totalorder %s19, 0
    %s22 = sadd.s32 %s21, 1
    %s23 = scalar_select %p20, %s21, %s22
    %p26 = pneg %p20
    %p27 = scmp.eq.s32.totalorder %s11, 1
    %p28 = por %p26, %p27
    %p29 = scmp.ne.s32.totalorder %s21, %s24
    %p30 = scmp.eq.s32.totalorder %s11, 0
    %p31 = por %p29, %p30
    %p32 = scmp.ne.s32.totalorder %s21, %s24
    %p33 = scmp.eq.s32.totalorder %s16, 1
    %p34 = por %p32, %p33
    %p35 = scmp.ne.s32.totalorder %s24, %s25
    %p36 = scmp.eq.s32.totalorder %s16, 0
    %p37 = por %p35, %p36
    %p38 = scmp.ne.s32.totalorder %s24, %s25
    %p39 = scmp.eq.s32.totalorder %s17, 1
    %p40 = por %p38, %p39
    %p42 = scmp.ne.s32.totalorder %s25, %s41
    %p43 = scmp.eq.s32.totalorder %s17, 0
    %p44 = por %p42, %p43
    %s45 = ssub.s32 %s11, %s18
    %p46 = scmp.eq.s32.totalorder %s45, 0
    %s48 = sadd.s32 %s47, 1
    %s49 = scalar_select %p46, %s47, %s48
    %p52 = pneg %p46
    %p53 = scmp.eq.s32.totalorder %s11, 1
    %p54 = por %p52, %p53
    %p55 = scmp.ne.s32.totalorder %s47, %s50
    %p56 = scmp.eq.s32.totalorder %s11, 0
    %p57 = por %p55, %p56
    %p58 = scmp.ne.s32.totalorder %s47, %s50
    %p59 = scmp.eq.s32.totalorder %s16, 1
    %p60 = por %p58, %p59
    %p61 = scmp.ne.s32.totalorder %s50, %s51
    %p62 = scmp.eq.s32.totalorder %s16, 0
    %p63 = por %p61, %p62
    %p64 = scmp.ne.s32.totalorder %s50, %s51
    %p65 = scmp.eq.s32.totalorder %s17, 1
    %p66 = por %p64, %p65
    %p68 = scmp.ne.s32.totalorder %s51, %s67
    %p69 = scmp.eq.s32.totalorder %s17, 0
    %p70 = por %p68, %p69
    %s72 = sadd.s32 %s71, 1
    %p75 = scmp.eq.s32.totalorder %s11, 1
    %p76 = scmp.ne.s32.totalorder %s71, %s73
    %p77 = scmp.eq.s32.totalorder %s11, 0
    %p78 = por %p76, %p77
    %p79 = scmp.ne.s32.totalorder %s71, %s73
    %p80 = scmp.eq.s32.totalorder %s16, 1
    %p81 = por %p79, %p80
    %p82 = scmp.ne.s32.totalorder %s73, %s74
    %p83 = scmp.eq.s32.totalorder %s16, 0
    %p84 = por %p82, %p83
    %p85 = scmp.ne.s32.totalorder %s73, %s74
    %p86 = scmp.eq.s32.totalorder %s17, 1
    %p87 = por %p85, %p86
    %p89 = scmp.ne.s32.totalorder %s74, %s88
    %p90 = scmp.eq.s32.totalorder %s17, 0
    %p91 = por %p89, %p90
    %s93 = sadd.s32 %s92, 1
    %p96 = scmp.eq.s32.totalorder %s11, 1
    %p97 = scmp.ne.s32.totalorder %s92, %s94
    %p98 = scmp.eq.s32.totalorder %s11, 0
    %p99 = por %p97, %p98
    %p100 = scmp.ne.s32.totalorder %s92, %s94
    %p101 = scmp.eq.s32.totalorder %s16, 1
    %p102 = por %p100, %p101
    %p103 = scmp.ne.s32.totalorder %s94, %s95
    %p104 = scmp.eq.s32.totalorder %s16, 0
    %p105 = por %p103, %p104
    %p106 = scmp.ne.s32.totalorder %s94, %s95
    %p107 = scmp.eq.s32.totalorder %s17, 1
    %p108 = por %p106, %p107
    %p110 = scmp.ne.s32.totalorder %s95, %s109
    %p111 = scmp.eq.s32.totalorder %s17, 0
    %p112 = por %p110, %p111
    %s114 = sadd.s32 %s113, 1
    %p117 = scmp.eq.s32.totalorder %s11, 1
    %p118 = scmp.ne.s32.totalorder %s113, %s115
    %p119 = scmp.eq.s32.totalorder %s11, 0
    %p120 = por %p118, %p119
    %p121 = scmp.ne.s32.totalorder %s113, %s115
    %p122 = scmp.eq.s32.totalorder %s16, 1
    %p123 = por %p121, %p122
    %p124 = scmp.ne.s32.totalorder %s115, %s116
    %p125 = scmp.eq.s32.totalorder %s16, 0
    %p126 = por %p124, %p125
    %p127 = scmp.ne.s32.totalorder %s115, %s116
    %p128 = scmp.eq.s32.totalorder %s17, 1
    %p129 = por %p127, %p128
    %p131 = scmp.ne.s32.totalorder %s116, %s130
    %p132 = scmp.eq.s32.totalorder %s17, 0
    %p133 = por %p131, %p132
    %s134 = ssub.s32 %s11, %s18
    %p135 = scmp.eq.s32.totalorder %s134, 0
    %s137 = sadd.s32 %s136, 1
    %s138 = scalar_select %p135, %s136, %s137
    %p141 = pneg %p135
    %p142 = scmp.eq.s32.totalorder %s11, 1
    %p143 = por %p141, %p142
    %p144 = scmp.ne.s32.totalorder %s136, %s139
    %p145 = scmp.eq.s32.totalorder %s11, 0
    %p146 = por %p144, %p145
    %p147 = scmp.ne.s32.totalorder %s136, %s139
    %p148 = scmp.eq.s32.totalorder %s16, 1
    %p149 = por %p147, %p148
    %p150 = scmp.ne.s32.totalorder %s139, %s140
    %p151 = scmp.eq.s32.totalorder %s16, 0
    %p152 = por %p150, %p151
    %p153 = scmp.ne.s32.totalorder %s139, %s140
    %p154 = scmp.eq.s32.totalorder %s17, 1
    %p155 = por %p153, %p154
    %p157 = scmp.ne.s32.totalorder %s140, %s156
    %p158 = scmp.eq.s32.totalorder %s17, 0
    %p159 = por %p157, %p158
    %p160 = scmp.le.s32.totalorder 1, %s11
    %p161 = scmp.lt.s32.totalorder %s11, 3
    %p162 = pnand %p160, %p161
    %p163 = pneg %p162
    // Predicated region
    $region9: #{cross_window_attention.7} parent=5 // pred_check
      _
    $region10: #{cross_window_attention.7} parent=5 // pred_check_branch
      %165 = sbr.rel (%p162) target = $region12
    $region11: #{cross_window_attention.7} parent=5 // pred_region
      %s166 = ssub.s32 %s11, 1
      // Predicated region
      $region13: #{cross_window_attention.7} parent=11 // pred_check
        %p167 = pneg %p84
      $region14: #{cross_window_attention.7} parent=11 // pred_check_branch
        %169 = sbr.rel (%p167) target = $region16
      $region15: #{cross_window_attention.7} parent=11 // pred_region
        _
      $region16: #{cross_window_attention.7} parent=11 // pred_fallthru
        _
      // Predicated region
      $region17: #{cross_window_attention.7} parent=11 // pred_check
        %p170 = pneg %p105
      $region18: #{cross_window_attention.7} parent=11 // pred_check_branch
        %172 = sbr.rel (%p170) target = $region20
      $region19: #{cross_window_attention.7} parent=11 // pred_region
        _
      $region20: #{cross_window_attention.7} parent=11 // pred_fallthru
        _
      // Predicated region
      $region21: #{cross_window_attention.7} parent=11 // pred_check
        %p173 = pneg %p126
      $region22: #{cross_window_attention.7} parent=11 // pred_check_branch
        %175 = sbr.rel (%p173) target = $region24
      $region23: #{cross_window_attention.7} parent=11 // pred_region
        _
      $region24: #{cross_window_attention.7} parent=11 // pred_fallthru
        _
    $region12: #{cross_window_attention.7} parent=5 // pred_fallthru
      _
    %p176 = scmp.lt.s32.totalorder %s11, 2
    // Predicated region
    $region25: #{cross_window_attention.7} parent=5 // pred_check
      %p177 = pneg %p176
    $region26: #{cross_window_attention.7} parent=5 // pred_check_branch
      %179 = sbr.rel (%p177) target = $region28
    $region27: #{cross_window_attention.7} parent=5 // pred_region
      // Predicated region
      $region29: #{cross_window_attention.7} parent=27 // pred_check
        %p180 = pneg %p31
      $region30: #{cross_window_attention.7} parent=27 // pred_check_branch
        %182 = sbr.rel (%p180) target = $region32
      $region31: #{cross_window_attention.7} parent=27 // pred_region
        %s183 = smul.u32 8, %s11
        %p184 = scmp.lt.s32.totalorder %s183, 15
        %s185 = scalar_select %p184, %s183, 15
        %s186 = smul.addr %s185, 4
        %s187 = scalar_lea.vmem %s0, %s186
        %s188 = smul.u32 8, %s11
      $region32: #{cross_window_attention.7} parent=27 // pred_fallthru
        _
      // Predicated region
      $region33: #{cross_window_attention.7} parent=27 // pred_check
        %p189 = pneg %p57
      $region34: #{cross_window_attention.7} parent=27 // pred_check_branch
        %191 = sbr.rel (%p189) target = $region36
      $region35: #{cross_window_attention.7} parent=27 // pred_region
        %s192 = smul.u32 8, %s11
        %p193 = scmp.lt.s32.totalorder %s192, 15
        %s194 = scalar_select %p193, %s192, 15
        %s195 = smul.addr %s194, 4
        %s196 = scalar_lea.vmem %s1, %s195
        %s197 = smul.u32 8, %s11
      $region36: #{cross_window_attention.7} parent=27 // pred_fallthru
        _
    $region28: #{cross_window_attention.7} parent=5 // pred_fallthru
      _
    %p198 = scmp.le.s32.totalorder 1, %s11
    %p199 = scmp.lt.s32.totalorder %s11, 3
    %p200 = pnand %p198, %p199
    %p201 = pneg %p200
    // Predicated region
    $region37: #{cross_window_attention.7} parent=5 // pred_check
      _
    $region38: #{cross_window_attention.7} parent=5 // pred_check_branch
      %203 = sbr.rel (%p200) target = $region40
    $region39: #{cross_window_attention.7} parent=5 // pred_region
      %s204 = ssub.s32 %s11, 1
      %s205 = smul.u32 8, %s16
      %p206 = scmp.lt.s32.totalorder %s205, 15
      %s207 = scalar_select %p206, %s205, 15
      %s208 = smul.addr %s207, 4
      %s209 = scalar_lea.vmem %s0, %s208
      %p210 = pneg %p37
      %p211 = pneg %p34
      %s212 = smul.u32 8, %s16
      %p213 = scmp.lt.s32.totalorder %s212, 15
      %s214 = scalar_select %p213, %s212, 15
      %s215 = smul.addr %s214, 4
      %s216 = scalar_lea.vmem %s1, %s215
      %p217 = pneg %p63
      %p218 = pneg %p60
      %p219 = pneg %p84
      %p220 = pneg %p81
      %p221 = pneg %p105
      %p222 = pneg %p102
      %p223 = pneg %p126
      %p224 = pneg %p123
      %p225 = pneg %p152
      %p226 = pneg %p149
      %s227 = smul.u32 8, %s16
      %p228 = scmp.lt.s32.totalorder %s227, 15
      %s229 = scalar_select %p228, %s227, 15
      %s230 = smul.addr %s229, 8
      %s231 = scalar_lea.vmem %s5, %s230
      %s232 = smul.u32 8, %s16
      %p233 = scmp.lt.s32.totalorder %s232, 15
      %s234 = scalar_select %p233, %s232, 15
      %s235 = smul.addr %s234, 4
      %s236 = scalar_lea.vmem %s0, %s235
      %s237 = smul.u32 8, %s16
      %s238 = smul.u32 8, %s16
      %p239 = scmp.lt.s32.totalorder %s238, 15
      %s240 = scalar_select %p239, %s238, 15
      %s241 = smul.addr %s240, 4
      %s242 = scalar_lea.vmem %s1, %s241
      %s243 = smul.u32 8, %s16
      %s244 = smul.u32 8, %s16
      %p245 = scmp.lt.s32.totalorder %s244, 15
      %s246 = scalar_select %p245, %s244, 15
      %s247 = smul.addr %s246, 8
      %s248 = scalar_lea.vmem %s5, %s247
      %s249 = smul.u32 8, %s16
      %v251 = vld [vmem:[%s236] sm:$0xf]
      %v252 = vld [vmem:[%s236 + $0x4] sm:$0xf]
      %v253 = vld [vmem:[%s236 + $0x8] sm:$0xf]
      %v254 = vld [vmem:[%s236 + $0xc] sm:$0xf]
      %v255 = vld [vmem:[%s236 + $0x10] sm:$0xf]
      %v256 = vld [vmem:[%s236 + $0x14] sm:$0xf]
      %v257 = vld [vmem:[%s236 + $0x18] sm:$0xf]
      %v258 = vld [vmem:[%s236 + $0x1c] sm:$0xf]
      %v259 = vld [vmem:[%s2] sm:$0xf]
      %v260 = vld [vmem:[%s242] sm:$0xf]
      %v261 = vld [vmem:[%s242 + $0x4] sm:$0xf]
      %v262 = vld [vmem:[%s242 + $0x8] sm:$0xf]
      %v263 = vld [vmem:[%s242 + $0xc] sm:$0xf]
      %v264 = vld [vmem:[%s242 + $0x10] sm:$0xf]
      %v265 = vld [vmem:[%s242 + $0x14] sm:$0xf]
      %v266 = vld [vmem:[%s242 + $0x18] sm:$0xf]
      %v267 = vld [vmem:[%s242 + $0x1c] sm:$0xf]
      %v268 = vld [vmem:[%s3] sm:$0xf]
      %v277 = vunpack.c.l.b16 %v260
      %v278 = vunpack.c.l.b16 %v261
      %v279 = vunpack.c.l.b16 %v262
      %v280 = vunpack.c.l.b16 %v263
      %v281 = vunpack.c.l.b16 %v264
      %v282 = vunpack.c.l.b16 %v265
      %v283 = vunpack.c.l.b16 %v266
      %v284 = vunpack.c.l.b16 %v267
      %v285 = vpack.c.b16 %v278, %v277
      %v286 = vpack.c.b16 %v280, %v279
      %v287 = vpack.c.b16 %v282, %v281
      %v288 = vpack.c.b16 %v284, %v283
      %vm289 = vcmask 64512
      %v291 = vsel %vm289, %v285, 0
      %v294 = vsel %vm289, %v286, 0
      %v297 = vsel %vm289, %v287, 0
      %v300 = vsel %vm289, %v288, 0
      %vm302 = vcmask 1043456
      %v304 = vsel %vm302, %v268, 0
      %306 = vmatprep.subr.bf16.mxu0 0
      %307 = vmatpush1.bf16.msra.mxu0 %v304
      %308 = vmatprep.subr.bf16.mxu0 0
      %309 = vmatpush1.bf16.msra.mxu0 0
      %310 = vmatprep.subr.bf16.mxu0 0
      %311 = vmatpush1.bf16.msra.mxu0 0
      %312 = vmatprep.subr.bf16.mxu0 0
      %313 = vmatpush1.bf16.msra.mxu0 0
      %314 = vmatprep.subr.bf16.mxu0 0
      %315 = vmatpush1.bf16.msra.mxu0 0
      %316 = vmatprep.subr.bf16.mxu0 0
      %317 = vmatpush1.bf16.msra.mxu0 0
      %318 = vmatprep.subr.bf16.mxu0 0
      %319 = vmatpush1.bf16.msra.mxu0 0
      %320 = vmatprep.subr.bf16.mxu0 0
      %321 = vmatpush1.bf16.msra.mxu0 0
      %322 = vmatprep.subr.bf16.mxu0 0
      %323 = vmatpush1.bf16.msra.mxu0 0
      %324 = vmatprep.subr.bf16.mxu0 0
      %325 = vmatpush1.bf16.msra.mxu0 0
      %326 = vmatprep.subr.bf16.mxu0 0
      %327 = vmatpush1.bf16.msra.mxu0 0
      %328 = vmatprep.subr.bf16.mxu0 0
      %329 = vmatpush1.bf16.msra.mxu0 0
      %330 = vmatprep.subr.bf16.mxu0 0
      %331 = vmatpush1.bf16.msra.mxu0 0
      %332 = vmatprep.subr.bf16.mxu0 0
      %333 = vmatpush1.bf16.msra.mxu0 0
      %334 = vmatprep.subr.bf16.mxu0 0
      %335 = vmatpush1.bf16.msra.mxu0 0
      %336 = vmatprep.subr.bf16.mxu0 0
      %337 = vmatpush1.bf16.msra.mxu0 0
      %338 = vmatprep.mubr.bf16.mxu0 0
      %339 = vmatmul.mubr.bf16.gmra.mrb[0].mxu0 %v291
      %v340 = vpop.f32.mrb[0].mxu0
      %v341 = vadd.f32 0.0, %v340
      %v342 = vpop.f32.mrb[0].mxu0
      %v343 = vpop.f32.mrb[0].mxu0
      %v344 = vadd.f32 0.0, %v343
      %v345 = vpop.f32.mrb[0].mxu0
      %346 = vmatprep.mubr.bf16.mxu0 0
      %347 = vmatmul.mubr.bf16.gmra.mrb[0].mxu0 %v294
      %v348 = vpop.f32.mrb[0].mxu0
      %v349 = vadd.f32 0.0, %v348
      %v350 = vpop.f32.mrb[0].mxu0
      %v351 = vpop.f32.mrb[0].mxu0
      %v352 = vadd.f32 0.0, %v351
      %v353 = vpop.f32.mrb[0].mxu0
      %354 = vmatprep.mubr.bf16.mxu0 0
      %355 = vmatmul.mubr.bf16.gmra.mrb[0].mxu0 %v297
      %v356 = vpop.f32.mrb[0].mxu0
      %v357 = vadd.f32 0.0, %v356
      %v358 = vpop.f32.mrb[0].mxu0
      %v359 = vpop.f32.mrb[0].mxu0
      %v360 = vadd.f32 0.0, %v359
      %v361 = vpop.f32.mrb[0].mxu0
      %362 = vmatprep.mubr.bf16.mxu0 0
      %363 = vmatmul.mubr.bf16.gmra.mrb[0].mxu0 %v300
      %v364 = vpop.f32.mrb[0].mxu0
      %v365 = vadd.f32 0.0, %v364
      %v366 = vpop.f32.mrb[0].mxu0
      %v367 = vpop.f32.mrb[0].mxu0
      %v368 = vadd.f32 0.0, %v367
      %v369 = vpop.f32.mrb[0].mxu0
      %370 = vdwg.mxu0
      %v379 = vunpack.c.l.b16 %v251
      %v380 = vunpack.c.l.b16 %v252
      %v381 = vunpack.c.l.b16 %v253
      %v382 = vunpack.c.l.b16 %v254
      %v383 = vunpack.c.l.b16 %v255
      %v384 = vunpack.c.l.b16 %v256
      %v385 = vunpack.c.l.b16 %v257
      %v386 = vunpack.c.l.b16 %v258
      %v387 = vpack.c.b16 %v380, %v379
      %v388 = vpack.c.b16 %v382, %v381
      %v389 = vpack.c.b16 %v384, %v383
      %v390 = vpack.c.b16 %v386, %v385
      %v392 = vsel %vm289, %v387, 0
      %v395 = vsel %vm289, %v388, 0
      %v398 = vsel %vm289, %v389, 0
      %v401 = vsel %vm289, %v390, 0
      %v404 = vsel %vm302, %v259, 0
      %406 = vmatprep.subr.bf16.mxu0 0
      %407 = vmatpush1.bf16.msra.mxu0 %v404
      %408 = vmatprep.subr.bf16.mxu0 0
      %409 = vmatpush1.bf16.msra.mxu0 0
      %410 = vmatprep.subr.bf16.mxu0 0
      %411 = vmatpush1.bf16.msra.mxu0 0
      %412 = vmatprep.subr.bf16.mxu0 0
      %413 = vmatpush1.bf16.msra.mxu0 0
      %414 = vmatprep.subr.bf16.mxu0 0
      %415 = vmatpush1.bf16.msra.mxu0 0
      %416 = vmatprep.subr.bf16.mxu0 0
      %417 = vmatpush1.bf16.msra.mxu0 0
      %418 = vmatprep.subr.bf16.mxu0 0
      %419 = vmatpush1.bf16.msra.mxu0 0
      %420 = vmatprep.subr.bf16.mxu0 0
      %421 = vmatpush1.bf16.msra.mxu0 0
      %422 = vmatprep.subr.bf16.mxu0 0
      %423 = vmatpush1.bf16.msra.mxu0 0
      %424 = vmatprep.subr.bf16.mxu0 0
      %425 = vmatpush1.bf16.msra.mxu0 0
      %426 = vmatprep.subr.bf16.mxu0 0
      %427 = vmatpush1.bf16.msra.mxu0 0
      %428 = vmatprep.subr.bf16.mxu0 0
      %429 = vmatpush1.bf16.msra.mxu0 0
      %430 = vmatprep.subr.bf16.mxu0 0
      %431 = vmatpush1.bf16.msra.mxu0 0
      %432 = vmatprep.subr.bf16.mxu0 0
      %433 = vmatpush1.bf16.msra.mxu0 0
      %434 = vmatprep.subr.bf16.mxu0 0
      %435 = vmatpush1.bf16.msra.mxu0 0
      %436 = vmatprep.subr.bf16.mxu0 0
      %437 = vmatpush1.bf16.msra.mxu0 0
      %438 = vmatprep.mubr.bf16.mxu0 0
      %439 = vmatmul.mubr.bf16.gmra.mrb[0].mxu0 %v392
      %v440 = vpop.f32.mrb[0].mxu0
      %v441 = vadd.f32 %v341, %v440
      %v442 = vpop.f32.mrb[0].mxu0
      %v443 = vpop.f32.mrb[0].mxu0
      %v444 = vadd.f32 %v344, %v443
      %v445 = vpop.f32.mrb[0].mxu0
      %446 = vmatprep.mubr.bf16.mxu0 0
      %447 = vmatmul.mubr.bf16.gmra.mrb[0].mxu0 %v395
      %v448 = vpop.f32.mrb[0].mxu0
      %v449 = vadd.f32 %v349, %v448
      %v450 = vpop.f32.mrb[0].mxu0
      %v451 = vpop.f32.mrb[0].mxu0
      %v452 = vadd.f32 %v352, %v451
      %v453 = vpop.f32.mrb[0].mxu0
      %454 = vmatprep.mubr.bf16.mxu0 0
      %455 = vmatmul.mubr.bf16.gmra.mrb[0].mxu0 %v398
      %v456 = vpop.f32.mrb[0].mxu0
      %v457 = vadd.f32 %v357, %v456
      %v458 = vpop.f32.mrb[0].mxu0
      %v459 = vpop.f32.mrb[0].mxu0
      %v460 = vadd.f32 %v360, %v459
      %v461 = vpop.f32.mrb[0].mxu0
      %462 = vmatprep.mubr.bf16.mxu0 0
      %463 = vmatmul.mubr.bf16.gmra.mrb[0].mxu0 %v401
      %v464 = vpop.f32.mrb[0].mxu0
      %v465 = vadd.f32 %v365, %v464
      %v466 = vpop.f32.mrb[0].mxu0
      %v467 = vpop.f32.mrb[0].mxu0
      %v468 = vadd.f32 %v368, %v467
      %v469 = vpop.f32.mrb[0].mxu0
      %470 = vdwg.mxu0
      %v471 = vld [vmem:[%s4] sm:$0x1]
      %v473 = vlaneseq
      %v474 = vshrl.u32 %v473, 7
      %v475 = vsub.s32 0, %v474
      %v476 = vrot.slane %v471, %v475
      %v478 = vadd.f32 %v441, %v476
      %v479 = vadd.f32 %v444, %v476
      %v480 = vadd.f32 %v449, %v476
      %v481 = vadd.f32 %v452, %v476
      %v482 = vadd.f32 %v457, %v476
      %v483 = vadd.f32 %v460, %v476
      %v484 = vadd.f32 %v465, %v476
      %v485 = vadd.f32 %v468, %v476
      %vm486 = vcmask 130048
      %487 = vst.msk [vmem:[%s248] sm:$0xff] %vm486, %v478
      %488 = vst.msk [vmem:[%s248 + $0x8] sm:$0xff] %vm486, %v479
      %489 = vst.msk [vmem:[%s248 + $0x10] sm:$0xff] %vm486, %v480
      %490 = vst.msk [vmem:[%s248 + $0x18] sm:$0xff] %vm486, %v481
      %491 = vst.msk [vmem:[%s248 + $0x20] sm:$0xff] %vm486, %v482
      %492 = vst.msk [vmem:[%s248 + $0x28] sm:$0xff] %vm486, %v483
      %493 = vst.msk [vmem:[%s248 + $0x30] sm:$0xff] %vm486, %v484
      %494 = vst.msk [vmem:[%s248 + $0x38] sm:$0xff] %vm486, %v485
      %s495 = smul.u32 8, %s16
      %p496 = scmp.lt.s32.totalorder %s495, 15
      %s497 = scalar_select %p496, %s495, 15
      %s498 = smul.addr %s497, 8
      %s499 = scalar_lea.vmem %s5, %s498
      // Predicated region
      $region41: #{cross_window_attention.7} parent=39 // pred_check
        %p500 = pneg %p149
      $region42: #{cross_window_attention.7} parent=39 // pred_check_branch
        %502 = sbr.rel (%p500) target = $region44
      $region43: #{cross_window_attention.7} parent=39 // pred_region
        %s503 = smul.u32 8, %s16
      $region44: #{cross_window_attention.7} parent=39 // pred_fallthru
        _
    $region40: #{cross_window_attention.7} parent=5 // pred_fallthru
      _
    %p504 = scmp.le.s32.totalorder 2, %s11
    // Predicated region
    $region45: #{cross_window_attention.7} parent=5 // pred_check
      %p505 = pneg %p504
    $region46: #{cross_window_attention.7} parent=5 // pred_check_branch
      %507 = sbr.rel (%p505) target = $region48
    $region47: #{cross_window_attention.7} parent=5 // pred_region
      %s508 = ssub.s32 %s11, 2
      // Predicated region
      $region49: #{cross_window_attention.7} parent=47 // pred_check
        %p509 = pneg %p155
      $region50: #{cross_window_attention.7} parent=47 // pred_check_branch
        %511 = sbr.rel (%p509) target = $region52
      $region51: #{cross_window_attention.7} parent=47 // pred_region
        %s512 = smul.u32 8, %s17
        %p513 = scmp.lt.s32.totalorder %s512, 15
        %s514 = scalar_select %p513, %s512, 15
        %s515 = smul.addr %s514, 8
        %s516 = scalar_lea.vmem %s5, %s515
      $region52: #{cross_window_attention.7} parent=47 // pred_fallthru
        _
    $region48: #{cross_window_attention.7} parent=5 // pred_fallthru
      _
  $region6: #{cross_window_attention.7} parent=0 // loop_footer
    %s15 = sadd.s32 1, %s11
  $region7: #{cross_window_attention.7} parent=0 // loop_footer_branch
    %10 = sbr.rel target = $region3
  $region8: #{cross_window_attention.7} parent=0 // loop_exit
    _

// kernel: cross_window_attention.6
$region0: #{cross_window_attention.6}
  #allocation0 [shape = 'u32[]', space=smem, size = 0x4, offset = 0x4, fixed_abs, tag = 'smem constant byte address 0x4 - core index']
  #allocation1 [shape = 'u32[144,128]{1,0:T(1,128)}', space=vmem, size = 0x12000, scoped, tag = 'internal scratch']
  %s0 = inlined_call_operand.vmem [shape: bf16[2,8,8,8], index: 0, kind: input, shape index: {}]
  %s1 = inlined_call_operand.vmem [shape: bf16[2,8,8,8], index: 1, kind: input, shape index: {}]
  %s2 = inlined_call_operand.vmem [shape: bf16[2,8,8,8], index: 2, kind: input, shape index: {}]
  %s3 = inlined_call_operand.vmem [shape: f32[3,3,8], index: 3, kind: input, shape index: {}]
  %s4 = inlined_call_operand.vmem [shape: f32[1,8], index: 4, kind: input, shape index: {}]
  %s5 = inlined_call_operand.vmem [shape: bf16[2,8,8,8], index: 5, kind: output, shape index: {}]
  %s6 = sld [smem:[#allocation0]]
  $region53: #{cross_window_attention.6} parent=0
    _
  %s8 = ssub.s32 1, %s6
  %s9 = scalar_select 0, %s8, %s6
  loop: start=0, step=1, limit=4
  $region2: #{cross_window_attention.6} parent=0 // loop_pre_header
    _
  $region3: #{cross_window_attention.6} parent=0 // loop_header
    %s11 = sphi 0, %s15
    %p12 = scmp.ge.s32.totalorder %s11, 4
    %s18 = sphi 0, %s30
    %s19 = sphi 0, %s26
    %s20 = sphi 0, %s18
    %s21 = sphi 0, %s19
    %s22 = sphi 0, %s20
    %s23 = sphi 0, %s21
    %s35 = sphi 0, %s37
    %s38 = sphi 0, %s35
    %s39 = sphi 0, %s38
    %s55 = sphi 0, %s39
    %s63 = sphi 0, %s65
    %s66 = sphi 0, %s63
    %s67 = sphi 0, %s66
    %s83 = sphi 0, %s67
    %s91 = sphi 0, %s93
    %s94 = sphi 0, %s91
    %s95 = sphi 0, %s94
    %s111 = sphi 0, %s95
    %s115 = sphi 0, %s115
    %s117 = sphi 0, %s115
    %s118 = sphi 0, %s117
    %s132 = sphi 0, %s118
    %s136 = sphi 0, %s136
    %s138 = sphi 0, %s136
    %s139 = sphi 0, %s138
    %s153 = sphi 0, %s139
    %s161 = sphi 0, %s163
    %s164 = sphi 0, %s161
    %s165 = sphi 0, %s164
    %s181 = sphi 0, %s165
  $region4: #{cross_window_attention.6} parent=0 // loop_header_branch
    %14 = sbr.rel (%p12) target = $region8
  $region5: #{cross_window_attention.6} parent=0 // loop_body
    %s16 = ssub.s32 %s11, 1
    %s17 = ssub.s32 %s11, 2
    %s24 = sadd.s32 1, %s19
    %p25 = scmp.ge.s32.totalorder %s24, 1
    %s26 = scalar_select %p25, 0, %s24
    %s27 = sadd.s32 1, %s18
    %s28 = scalar_select %p25, %s27, %s18
    %p29 = scmp.ge.s32.totalorder %s28, 2
    %s30 = scalar_select %p29, 0, %s28
    %s31 = ssub.s32 %s18, %s30
    %s32 = ssub.s32 %s19, %s26
    %s33 = sor.u32 %s31, %s32
    %p34 = scmp.eq.s32.totalorder %s33, 0
    %s36 = sadd.s32 %s35, 1
    %s37 = scalar_select %p34, %s35, %s36
    %p40 = pneg %p34
    %p41 = scmp.eq.s32.totalorder %s11, 1
    %p42 = por %p40, %p41
    %p43 = scmp.ne.s32.totalorder %s35, %s38
    %p44 = scmp.eq.s32.totalorder %s11, 0
    %p45 = por %p43, %p44
    %p46 = scmp.ne.s32.totalorder %s35, %s38
    %p47 = scmp.eq.s32.totalorder %s16, 1
    %p48 = por %p46, %p47
    %p49 = scmp.ne.s32.totalorder %s38, %s39
    %p50 = scmp.eq.s32.totalorder %s16, 0
    %p51 = por %p49, %p50
    %p52 = scmp.ne.s32.totalorder %s38, %s39
    %p53 = scmp.eq.s32.totalorder %s17, 1
    %p54 = por %p52, %p53
    %p56 = scmp.ne.s32.totalorder %s39, %s55
    %p57 = scmp.eq.s32.totalorder %s17, 0
    %p58 = por %p56, %p57
    %s59 = ssub.s32 %s18, %s30
    %s60 = ssub.s32 %s19, %s26
    %s61 = sor.u32 %s59, %s60
    %p62 = scmp.eq.s32.totalorder %s61, 0
    %s64 = sadd.s32 %s63, 1
    %s65 = scalar_select %p62, %s63, %s64
    %p68 = pneg %p62
    %p69 = scmp.eq.s32.totalorder %s11, 1
    %p70 = por %p68, %p69
    %p71 = scmp.ne.s32.totalorder %s63, %s66
    %p72 = scmp.eq.s32.totalorder %s11, 0
    %p73 = por %p71, %p72
    %p74 = scmp.ne.s32.totalorder %s63, %s66
    %p75 = scmp.eq.s32.totalorder %s16, 1
    %p76 = por %p74, %p75
    %p77 = scmp.ne.s32.totalorder %s66, %s67
    %p78 = scmp.eq.s32.totalorder %s16, 0
    %p79 = por %p77, %p78
    %p80 = scmp.ne.s32.totalorder %s66, %s67
    %p81 = scmp.eq.s32.totalorder %s17, 1
    %p82 = por %p80, %p81
    %p84 = scmp.ne.s32.totalorder %s67, %s83
    %p85 = scmp.eq.s32.totalorder %s17, 0
    %p86 = por %p84, %p85
    %s87 = ssub.s32 %s18, %s30
    %s88 = ssub.s32 %s19, %s26
    %s89 = sor.u32 %s87, %s88
    %p90 = scmp.eq.s32.totalorder %s89, 0
    %s92 = sadd.s32 %s91, 1
    %s93 = scalar_select %p90, %s91, %s92
    %p96 = pneg %p90
    %p97 = scmp.eq.s32.totalorder %s11, 1
    %p98 = por %p96, %p97
    %p99 = scmp.ne.s32.totalorder %s91, %s94
    %p100 = scmp.eq.s32.totalorder %s11, 0
    %p101 = por %p99, %p100
    %p102 = scmp.ne.s32.totalorder %s91, %s94
    %p103 = scmp.eq.s32.totalorder %s16, 1
    %p104 = por %p102, %p103
    %p105 = scmp.ne.s32.totalorder %s94, %s95
    %p106 = scmp.eq.s32.totalorder %s16, 0
    %p107 = por %p105, %p106
    %p108 = scmp.ne.s32.totalorder %s94, %s95
    %p109 = scmp.eq.s32.totalorder %s17, 1
    %p110 = por %p108, %p109
    %p112 = scmp.ne.s32.totalorder %s95, %s111
    %p113 = scmp.eq.s32.totalorder %s17, 0
    %p114 = por %p112, %p113
    %s116 = sadd.s32 %s115, 1
    %p119 = scmp.eq.s32.totalorder %s11, 1
    %p120 = scmp.ne.s32.totalorder %s115, %s117
    %p121 = scmp.eq.s32.totalorder %s11, 0
    %p122 = por %p120, %p121
    %p123 = scmp.ne.s32.totalorder %s115, %s117
    %p124 = scmp.eq.s32.totalorder %s16, 1
    %p125 = por %p123, %p124
    %p126 = scmp.ne.s32.totalorder %s117, %s118
    %p127 = scmp.eq.s32.totalorder %s16, 0
    %p128 = por %p126, %p127
    %p129 = scmp.ne.s32.totalorder %s117, %s118
    %p130 = scmp.eq.s32.totalorder %s17, 1
    %p131 = por %p129, %p130
    %p133 = scmp.ne.s32.totalorder %s118, %s132
    %p134 = scmp.eq.s32.totalorder %s17, 0
    %p135 = por %p133, %p134
    %s137 = sadd.s32 %s136, 1
    %p140 = scmp.eq.s32.totalorder %s11, 1
    %p141 = scmp.ne.s32.totalorder %s136, %s138
    %p142 = scmp.eq.s32.totalorder %s11, 0
    %p143 = por %p141, %p142
    %p144 = scmp.ne.s32.totalorder %s136, %s138
    %p145 = scmp.eq.s32.totalorder %s16, 1
    %p146 = por %p144, %p145
    %p147 = scmp.ne.s32.totalorder %s138, %s139
    %p148 = scmp.eq.s32.totalorder %s16, 0
    %p149 = por %p147, %p148
    %p150 = scmp.ne.s32.totalorder %s138, %s139
    %p151 = scmp.eq.s32.totalorder %s17, 1
    %p152 = por %p150, %p151
    %p154 = scmp.ne.s32.totalorder %s139, %s153
    %p155 = scmp.eq.s32.totalorder %s17, 0
    %p156 = por %p154, %p155
    %s157 = ssub.s32 %s18, %s30
    %s158 = ssub.s32 %s19, %s26
    %s159 = sor.u32 %s157, %s158
    %p160 = scmp.eq.s32.totalorder %s159, 0
    %s162 = sadd.s32 %s161, 1
    %s163 = scalar_select %p160, %s161, %s162
    %p166 = pneg %p160
    %p167 = scmp.eq.s32.totalorder %s11, 1
    %p168 = por %p166, %p167
    %p169 = scmp.ne.s32.totalorder %s161, %s164
    %p170 = scmp.eq.s32.totalorder %s11, 0
    %p171 = por %p169, %p170
    %p172 = scmp.ne.s32.totalorder %s161, %s164
    %p173 = scmp.eq.s32.totalorder %s16, 1
    %p174 = por %p172, %p173
    %p175 = scmp.ne.s32.totalorder %s164, %s165
    %p176 = scmp.eq.s32.totalorder %s16, 0
    %p177 = por %p175, %p176
    %p178 = scmp.ne.s32.totalorder %s164, %s165
    %p179 = scmp.eq.s32.totalorder %s17, 1
    %p180 = por %p178, %p179
    %p182 = scmp.ne.s32.totalorder %s165, %s181
    %p183 = scmp.eq.s32.totalorder %s17, 0
    %p184 = por %p182, %p183
    %p185 = scmp.le.s32.totalorder 1, %s11
    %p186 = scmp.lt.s32.totalorder %s11, 3
    %p187 = pnand %p185, %p186
    %p188 = pneg %p187
    // Predicated region
    $region9: #{cross_window_attention.6} parent=5 // pred_check
      _
    $region10: #{cross_window_attention.6} parent=5 // pred_check_branch
      %190 = sbr.rel (%p187) target = $region12
    $region11: #{cross_window_attention.6} parent=5 // pred_region
      %s191 = ssub.s32 %s11, 1
      // Predicated region
      $region13: #{cross_window_attention.6} parent=11 // pred_check
        %p192 = pneg %p128
      $region14: #{cross_window_attention.6} parent=11 // pred_check_branch
        %194 = sbr.rel (%p192) target = $region16
      $region15: #{cross_window_attention.6} parent=11 // pred_region
        _
      $region16: #{cross_window_attention.6} parent=11 // pred_fallthru
        _
      // Predicated region
      $region17: #{cross_window_attention.6} parent=11 // pred_check
        %p195 = pneg %p149
      $region18: #{cross_window_attention.6} parent=11 // pred_check_branch
        %197 = sbr.rel (%p195) target = $region20
      $region19: #{cross_window_attention.6} parent=11 // pred_region
        _
      $region20: #{cross_window_attention.6} parent=11 // pred_fallthru
        _
    $region12: #{cross_window_attention.6} parent=5 // pred_fallthru
      _
    %p198 = scmp.lt.s32.totalorder %s11, 2
    // Predicated region
    $region21: #{cross_window_attention.6} parent=5 // pred_check
      %p199 = pneg %p198
    $region22: #{cross_window_attention.6} parent=5 // pred_check_branch
      %201 = sbr.rel (%p199) target = $region24
    $region23: #{cross_window_attention.6} parent=5 // pred_region
      // Predicated region
      $region25: #{cross_window_attention.6} parent=23 // pred_check
        %p202 = pneg %p45
      $region26: #{cross_window_attention.6} parent=23 // pred_check_branch
        %204 = sbr.rel (%p202) target = $region28
      $region27: #{cross_window_attention.6} parent=23 // pred_region
        %s205 = smul.u32 8, %s19
        %p206 = scmp.lt.s32.totalorder %s18, 1
        %s207 = scalar_select %p206, %s18, 1
        %p208 = scmp.lt.s32.totalorder %s205, 7
        %s209 = scalar_select %p208, %s205, 7
        %s210 = smul.addr %s207, 8
        %s211 = sadd.s32 %s209, %s210
        %s212 = smul.addr %s211, 4
        %s213 = scalar_lea.vmem %s0, %s212
        %s214 = smul.u32 8, %s19
      $region28: #{cross_window_attention.6} parent=23 // pred_fallthru
        _
      // Predicated region
      $region29: #{cross_window_attention.6} parent=23 // pred_check
        %p215 = pneg %p73
      $region30: #{cross_window_attention.6} parent=23 // pred_check_branch
        %217 = sbr.rel (%p215) target = $region32
      $region31: #{cross_window_attention.6} parent=23 // pred_region
        %s218 = smul.u32 8, %s19
        %p219 = scmp.lt.s32.totalorder %s18, 1
        %s220 = scalar_select %p219, %s18, 1
        %p221 = scmp.lt.s32.totalorder %s218, 7
        %s222 = scalar_select %p221, %s218, 7
        %s223 = smul.addr %s220, 8
        %s224 = sadd.s32 %s222, %s223
        %s225 = smul.addr %s224, 4
        %s226 = scalar_lea.vmem %s1, %s225
        %s227 = smul.u32 8, %s19
      $region32: #{cross_window_attention.6} parent=23 // pred_fallthru
        _
      // Predicated region
      $region33: #{cross_window_attention.6} parent=23 // pred_check
        %p228 = pneg %p101
      $region34: #{cross_window_attention.6} parent=23 // pred_check_branch
        %230 = sbr.rel (%p228) target = $region36
      $region35: #{cross_window_attention.6} parent=23 // pred_region
        %s231 = smul.u32 8, %s19
        %p232 = scmp.lt.s32.totalorder %s18, 1
        %s233 = scalar_select %p232, %s18, 1
        %p234 = scmp.lt.s32.totalorder %s231, 7
        %s235 = scalar_select %p234, %s231, 7
        %s236 = smul.addr %s233, 8
        %s237 = sadd.s32 %s235, %s236
        %s238 = smul.addr %s237, 4
        %s239 = scalar_lea.vmem %s2, %s238
        %s240 = smul.u32 8, %s19
      $region36: #{cross_window_attention.6} parent=23 // pred_fallthru
        _
    $region24: #{cross_window_attention.6} parent=5 // pred_fallthru
      _
    %p241 = scmp.le.s32.totalorder 1, %s11
    %p242 = scmp.lt.s32.totalorder %s11, 3
    %p243 = pnand %p241, %p242
    %p244 = pneg %p243
    // Predicated region
    $region37: #{cross_window_attention.6} parent=5 // pred_check
      _
    $region38: #{cross_window_attention.6} parent=5 // pred_check_branch
      %246 = sbr.rel (%p243) target = $region40
    $region39: #{cross_window_attention.6} parent=5 // pred_region
      %s247 = ssub.s32 %s11, 1
      %s248 = smul.u32 8, %s21
      %p249 = scmp.lt.s32.totalorder %s20, 1
      %s250 = scalar_select %p249, %s20, 1
      %p251 = scmp.lt.s32.totalorder %s248, 7
      %s252 = scalar_select %p251, %s248, 7
      %s253 = smul.addr %s250, 8
      %s254 = sadd.s32 %s252, %s253
      %s255 = smul.addr %s254, 4
      %s256 = scalar_lea.vmem %s0, %s255
      %p257 = pneg %p51
      %p258 = pneg %p48
      %s259 = smul.u32 8, %s21
      %p260 = scmp.lt.s32.totalorder %s20, 1
      %s261 = scalar_select %p260, %s20, 1
      %p262 = scmp.lt.s32.totalorder %s259, 7
      %s263 = scalar_select %p262, %s259, 7
      %s264 = smul.addr %s261, 8
      %s265 = sadd.s32 %s263, %s264
      %s266 = smul.addr %s265, 4
      %s267 = scalar_lea.vmem %s1, %s266
      %p268 = pneg %p79
      %p269 = pneg %p76
      %s270 = smul.u32 8, %s21
      %p271 = scmp.lt.s32.totalorder %s20, 1
      %s272 = scalar_select %p271, %s20, 1
      %p273 = scmp.lt.s32.totalorder %s270, 7
      %s274 = scalar_select %p273, %s270, 7
      %s275 = smul.addr %s272, 8
      %s276 = sadd.s32 %s274, %s275
      %s277 = smul.addr %s276, 4
      %s278 = scalar_lea.vmem %s2, %s277
      %p279 = pneg %p107
      %p280 = pneg %p104
      %p281 = pneg %p128
      %p282 = pneg %p125
      %p283 = pneg %p149
      %p284 = pneg %p146
      %p285 = pneg %p177
      %p286 = pneg %p174
      %s287 = smul.u32 8, %s21
      %p288 = scmp.lt.s32.totalorder %s20, 1
      %s289 = scalar_select %p288, %s20, 1
      %p290 = scmp.lt.s32.totalorder %s287, 7
      %s291 = scalar_select %p290, %s287, 7
      %s292 = smul.addr %s289, 8
      %s293 = sadd.s32 %s291, %s292
      %s294 = smul.addr %s293, 4
      %s295 = scalar_lea.vmem %s5, %s294
      %s296 = smul.u32 8, %s21
      %p297 = scmp.lt.s32.totalorder %s20, 1
      %s298 = scalar_select %p297, %s20, 1
      %p299 = scmp.lt.s32.totalorder %s296, 7
      %s300 = scalar_select %p299, %s296, 7
      %s301 = smul.addr %s298, 8
      %s302 = sadd.s32 %s300, %s301
      %s303 = smul.addr %s302, 4
      %s304 = scalar_lea.vmem %s0, %s303
      %s305 = smul.u32 8, %s21
      %s306 = smul.u32 8, %s21
      %p307 = scmp.lt.s32.totalorder %s20, 1
      %s308 = scalar_select %p307, %s20, 1
      %p309 = scmp.lt.s32.totalorder %s306, 7
      %s310 = scalar_select %p309, %s306, 7
      %s311 = smul.addr %s308, 8
      %s312 = sadd.s32 %s310, %s311
      %s313 = smul.addr %s312, 4
      %s314 = scalar_lea.vmem %s1, %s313
      %s315 = smul.u32 8, %s21
      %s316 = smul.u32 8, %s21
      %p317 = scmp.lt.s32.totalorder %s20, 1
      %s318 = scalar_select %p317, %s20, 1
      %p319 = scmp.lt.s32.totalorder %s316, 7
      %s320 = scalar_select %p319, %s316, 7
      %s321 = smul.addr %s318, 8
      %s322 = sadd.s32 %s320, %s321
      %s323 = smul.addr %s322, 4
      %s324 = scalar_lea.vmem %s2, %s323
      %s325 = smul.u32 8, %s21
      %s326 = smul.u32 8, %s21
      %p327 = scmp.lt.s32.totalorder %s20, 1
      %s328 = scalar_select %p327, %s20, 1
      %p329 = scmp.lt.s32.totalorder %s326, 7
      %s330 = scalar_select %p329, %s326, 7
      %s331 = smul.addr %s328, 8
      %s332 = sadd.s32 %s330, %s331
      %s333 = smul.addr %s332, 4
      %s334 = scalar_lea.vmem %s5, %s333
      %s335 = smul.u32 8, %s21
      %v337 = vld [vmem:[%s304] sm:$0xf]
      %v338 = vld [vmem:[%s304 + $0x4] sm:$0xf]
      %v339 = vld [vmem:[%s304 + $0x8] sm:$0xf]
      %v340 = vld [vmem:[%s304 + $0xc] sm:$0xf]
      %v341 = vld [vmem:[%s304 + $0x10] sm:$0xf]
      %v342 = vld [vmem:[%s304 + $0x14] sm:$0xf]
      %v343 = vld [vmem:[%s304 + $0x18] sm:$0xf]
      %v344 = vld [vmem:[%s304 + $0x1c] sm:$0xf]
      %v345 = vld [vmem:[%s314] sm:$0xf]
      %v346 = vld [vmem:[%s314 + $0x4] sm:$0xf]
      %v347 = vld [vmem:[%s314 + $0x8] sm:$0xf]
      %v348 = vld [vmem:[%s314 + $0xc] sm:$0xf]
      %v349 = vld [vmem:[%s314 + $0x10] sm:$0xf]
      %v350 = vld [vmem:[%s314 + $0x14] sm:$0xf]
      %v351 = vld [vmem:[%s314 + $0x18] sm:$0xf]
      %v352 = vld [vmem:[%s314 + $0x1c] sm:$0xf]
      %v353 = vld [vmem:[%s324] sm:$0xf]
      %v354 = vld [vmem:[%s324 + $0x4] sm:$0xf]
      %v355 = vld [vmem:[%s324 + $0x8] sm:$0xf]
      %v356 = vld [vmem:[%s324 + $0xc] sm:$0xf]
      %v357 = vld [vmem:[%s324 + $0x10] sm:$0xf]
      %v358 = vld [vmem:[%s324 + $0x14] sm:$0xf]
      %v359 = vld [vmem:[%s324 + $0x18] sm:$0xf]
      %v360 = vld [vmem:[%s324 + $0x1c] sm:$0xf]
      %v361 = vunpack.c.l.bf16 %v353
      %v362 = vunpack.c.l.bf16 %v354
      %v363 = vunpack.c.l.bf16 %v355
      %v364 = vunpack.c.l.bf16 %v356
      %v365 = vunpack.c.l.bf16 %v357
      %v366 = vunpack.c.l.bf16 %v358
      %v367 = vunpack.c.l.bf16 %v359
      %v368 = vunpack.c.l.bf16 %v360
      %v377 = vrot.slane %v361, 7
      %v378 = vrot.slane %v362, 7
      %v379 = vrot.slane %v363, 7
      %v380 = vrot.slane %v364, 7
      %v381 = vrot.slane %v365, 7
      %v382 = vrot.slane %v366, 7
      %v383 = vrot.slane %v367, 7
      %v384 = vrot.slane %v368, 7
      %vm393 = vcmask 1040384
      %v394 = vsel %vm393, 0.0, %v377
      %v395 = vsel %vm393, 0.0, %v378
      %v396 = vsel %vm393, 0.0, %v379
      %v397 = vsel %vm393, 0.0, %v380
      %v398 = vsel %vm393, 0.0, %v381
      %v399 = vsel %vm393, 0.0, %v382
      %v400 = vsel %vm393, 0.0, %v383
      %v401 = vsel %vm393, 0.0, %v384
      %v402 = vrot.slane %v361, 1
      %v403 = vrot.slane %v362, 1
      %v404 = vrot.slane %v363, 1
      %v405 = vrot.slane %v364, 1
      %v406 = vrot.slane %v365, 1
      %v407 = vrot.slane %v366, 1
      %v408 = vrot.slane %v367, 1
      %v409 = vrot.slane %v368, 1
      %vm418 = vcmask 1046528
      %v419 = vsel %vm418, %v402, 0.0
      %v420 = vsel %vm418, %v403, 0.0
      %v421 = vsel %vm418, %v404, 0.0
      %v422 = vsel %vm418, %v405, 0.0
      %v423 = vsel %vm418, %v406, 0.0
      %v424 = vsel %vm418, %v407, 0.0
      %v425 = vsel %vm418, %v408, 0.0
      %v426 = vsel %vm418, %v409, 0.0
      %v427 = vld [vmem:[%s4] sm:$0x1]
      %v429 = vlaneseq
      %v430 = vshrl.u32 %v429, 7
      %v431 = vsub.s32 0, %v430
      %v432 = vrot.slane %v427, %v431
      %v434 = vadd.f32 %v432, 0.0
      %v435 = vld [vmem:[%s3] sm:$0x1]
      %v436 = vlaneseq
      %v437 = vshrl.u32 %v436, 7
      %v438 = vsub.s32 0, %v437
      %v439 = vrot.slane %v435, %v438
      %v440 = vmul.f32 %v439, 0.0
      %v441 = vmul.f32 %v394, %v439
      %v442 = vmul.f32 %v395, %v439
      %v443 = vmul.f32 %v396, %v439
      %v444 = vmul.f32 %v398, %v439
      %v445 = vmul.f32 %v399, %v439
      %v446 = vmul.f32 %v400, %v439
      %v447 = vadd.f32 %v434, %v440
      %v448 = vadd.f32 %v434, %v441
      %v449 = vadd.f32 %v434, %v442
      %v450 = vadd.f32 %v434, %v443
      %v451 = vadd.f32 %v434, %v444
      %v452 = vadd.f32 %v434, %v445
      %v453 = vadd.f32 %v434, %v446
      %v454 = vld [vmem:[%s3 + $0x1] sm:$0x1]
      %v455 = vlaneseq
      %v456 = vshrl.u32 %v455, 7
      %v457 = vsub.s32 0, %v456
      %v458 = vrot.slane %v454, %v457
      %v459 = vmul.f32 %v458, 0.0
      %v460 = vmul.f32 %v361, %v458
      %v461 = vmul.f32 %v362, %v458
      %v462 = vmul.f32 %v363, %v458
      %v463 = vmul.f32 %v365, %v458
      %v464 = vmul.f32 %v366, %v458
      %v465 = vmul.f32 %v367, %v458
      %v466 = vadd.f32 %v447, %v459
      %v467 = vadd.f32 %v448, %v460
      %v468 = vadd.f32 %v449, %v461
      %v469 = vadd.f32 %v450, %v462
      %v470 = vadd.f32 %v451, %v463
      %v471 = vadd.f32 %v452, %v464
      %v472 = vadd.f32 %v453, %v465
      %v473 = vld [vmem:[%s3 + $0x2] sm:$0x1]
      %v474 = vlaneseq
      %v475 = vshrl.u32 %v474, 7
      %v476 = vsub.s32 0, %v475
      %v477 = vrot.slane %v473, %v476
      %v478 = vmul.f32 %v477, 0.0
      %v479 = vmul.f32 %v419, %v477
      %v480 = vmul.f32 %v420, %v477
      %v481 = vmul.f32 %v421, %v477
      %v482 = vmul.f32 %v423, %v477
      %v483 = vmul.f32 %v424, %v477
      %v484 = vmul.f32 %v425, %v477
      %v485 = vadd.f32 %v466, %v478
      %v486 = vadd.f32 %v467, %v479
      %v487 = vadd.f32 %v468, %v480
      %v488 = vadd.f32 %v469, %v481
      %v489 = vadd.f32 %v470, %v482
      %v490 = vadd.f32 %v471, %v483
      %v491 = vadd.f32 %v472, %v484
      %s492 = scalar_lea.vmem %s3, 4
      %v493 = vld [vmem:[%s492] sm:$0x1]
      %v494 = vlaneseq
      %v495 = vshrl.u32 %v494, 7
      %v496 = vsub.s32 0, %v495
      %v497 = vrot.slane %v493, %v496
      %v498 = vmul.f32 %v394, %v497
      %v499 = vmul.f32 %v395, %v497
      %v500 = vmul.f32 %v396, %v497
      %v501 = vmul.f32 %v397, %v497
      %v502 = vmul.f32 %v398, %v497
      %v503 = vmul.f32 %v399, %v497
      %v504 = vmul.f32 %v400, %v497
      %v505 = vmul.f32 %v401, %v497
      %v506 = vadd.f32 %v485, %v498
      %v507 = vadd.f32 %v486, %v499
      %v508 = vadd.f32 %v487, %v500
      %v509 = vadd.f32 %v488, %v501
      %v510 = vadd.f32 %v485, %v502
      %v511 = vadd.f32 %v489, %v503
      %v512 = vadd.f32 %v490, %v504
      %v513 = vadd.f32 %v491, %v505
      %v514 = vld [vmem:[%s492 + $0x1] sm:$0x1]
      %v515 = vlaneseq
      %v516 = vshrl.u32 %v515, 7
      %v517 = vsub.s32 0, %v516
      %v518 = vrot.slane %v514, %v517
      %v519 = vmul.f32 %v361, %v518
      %v520 = vmul.f32 %v362, %v518
      %v521 = vmul.f32 %v363, %v518
      %v522 = vmul.f32 %v364, %v518
      %v523 = vmul.f32 %v365, %v518
      %v524 = vmul.f32 %v366, %v518
      %v525 = vmul.f32 %v367, %v518
      %v526 = vmul.f32 %v368, %v518
      %v527 = vadd.f32 %v506, %v519
      %v528 = vadd.f32 %v507, %v520
      %v529 = vadd.f32 %v508, %v521
      %v530 = vadd.f32 %v509, %v522
      %v531 = vadd.f32 %v510, %v523
      %v532 = vadd.f32 %v511, %v524
      %v533 = vadd.f32 %v512, %v525
      %v534 = vadd.f32 %v513, %v526
      %v535 = vld [vmem:[%s492 + $0x2] sm:$0x1]
      %v536 = vlaneseq
      %v537 = vshrl.u32 %v536, 7
      %v538 = vsub.s32 0, %v537
      %v539 = vrot.slane %v535, %v538
      %v540 = vmul.f32 %v419, %v539
      %v541 = vmul.f32 %v420, %v539
      %v542 = vmul.f32 %v421, %v539
      %v543 = vmul.f32 %v422, %v539
      %v544 = vmul.f32 %v423, %v539
      %v545 = vmul.f32 %v424, %v539
      %v546 = vmul.f32 %v425, %v539
      %v547 = vmul.f32 %v426, %v539
      %v548 = vadd.f32 %v527, %v540
      %v549 = vadd.f32 %v528, %v541
      %v550 = vadd.f32 %v529, %v542
      %v551 = vadd.f32 %v530, %v543
      %v552 = vadd.f32 %v531, %v544
      %v553 = vadd.f32 %v532, %v545
      %v554 = vadd.f32 %v533, %v546
      %v555 = vadd.f32 %v534, %v547
      %s556 = scalar_lea.vmem %s3, 8
      %v557 = vld [vmem:[%s556] sm:$0x1]
      %v558 = vlaneseq
      %v559 = vshrl.u32 %v558, 7
      %v560 = vsub.s32 0, %v559
      %v561 = vrot.slane %v557, %v560
      %v562 = vmul.f32 %v395, %v561
      %v563 = vmul.f32 %v396, %v561
      %v564 = vmul.f32 %v397, %v561
      %v565 = vmul.f32 %v561, 0.0
      %v566 = vmul.f32 %v399, %v561
      %v567 = vmul.f32 %v400, %v561
      %v568 = vmul.f32 %v401, %v561
      %v569 = vadd.f32 %v548, %v562
      %v570 = vadd.f32 %v549, %v563
      %v571 = vadd.f32 %v550, %v564
      %v572 = vadd.f32 %v551, %v565
      %v573 = vadd.f32 %v552, %v566
      %v574 = vadd.f32 %v553, %v567
      %v575 = vadd.f32 %v554, %v568
      %v576 = vadd.f32 %v555, %v565
      %v577 = vld [vmem:[%s556 + $0x1] sm:$0x1]
      %v578 = vlaneseq
      %v579 = vshrl.u32 %v578, 7
      %v580 = vsub.s32 0, %v579
      %v581 = vrot.slane %v577, %v580
      %v582 = vmul.f32 %v362, %v581
      %v583 = vmul.f32 %v363, %v581
      %v584 = vmul.f32 %v364, %v581
      %v585 = vmul.f32 %v581, 0.0
      %v586 = vmul.f32 %v366, %v581
      %v587 = vmul.f32 %v367, %v581
      %v588 = vmul.f32 %v368, %v581
      %v589 = vadd.f32 %v569, %v582
      %v590 = vadd.f32 %v570, %v583
      %v591 = vadd.f32 %v571, %v584
      %v592 = vadd.f32 %v572, %v585
      %v593 = vadd.f32 %v573, %v586
      %v594 = vadd.f32 %v574, %v587
      %v595 = vadd.f32 %v575, %v588
      %v596 = vadd.f32 %v576, %v585
      %v597 = vld [vmem:[%s556 + $0x2] sm:$0x1]
      %v598 = vlaneseq
      %v599 = vshrl.u32 %v598, 7
      %v600 = vsub.s32 0, %v599
      %v601 = vrot.slane %v597, %v600
      %v602 = vmul.f32 %v420, %v601
      %v603 = vmul.f32 %v421, %v601
      %v604 = vmul.f32 %v422, %v601
      %v605 = vmul.f32 %v601, 0.0
      %v606 = vmul.f32 %v424, %v601
      %v607 = vmul.f32 %v425, %v601
      %v608 = vmul.f32 %v426, %v601
      %v609 = vadd.f32 %v589, %v602
      %v610 = vadd.f32 %v590, %v603
      %v611 = vadd.f32 %v591, %v604
      %v612 = vadd.f32 %v592, %v605
      %v613 = vadd.f32 %v593, %v606
      %v614 = vadd.f32 %v594, %v607
      %v615 = vadd.f32 %v595, %v608
      %v616 = vadd.f32 %v596, %v605
      %625 = vrot.lane.b32.xlu0 %v337, 124
      %v626 = vpop.permute.xlu0 %625
      %627 = vrot.lane.b32.xlu0 %v338, 124
      %v628 = vpop.permute.xlu0 %627
      %629 = vrot.lane.b32.xlu0 %v339, 124
      %v630 = vpop.permute.xlu0 %629
      %631 = vrot.lane.b32.xlu0 %v340, 124
      %v632 = vpop.permute.xlu0 %631
      %633 = vrot.lane.b32.xlu0 %v341, 124
      %v634 = vpop.permute.xlu0 %633
      %635 = vrot.lane.b32.xlu0 %v342, 124
      %v636 = vpop.permute.xlu0 %635
      %637 = vrot.lane.b32.xlu0 %v343, 124
      %v638 = vpop.permute.xlu0 %637
      %639 = vrot.lane.b32.xlu0 %v344, 124
      %v640 = vpop.permute.xlu0 %639
      %649 = vrot.lane.b32.xlu0 %v345, 124
      %v650 = vpop.permute.xlu0 %649
      %651 = vrot.lane.b32.xlu0 %v346, 124
      %v652 = vpop.permute.xlu0 %651
      %653 = vrot.lane.b32.xlu0 %v347, 124
      %v654 = vpop.permute.xlu0 %653
      %655 = vrot.lane.b32.xlu0 %v348, 124
      %v656 = vpop.permute.xlu0 %655
      %657 = vrot.lane.b32.xlu0 %v349, 124
      %v658 = vpop.permute.xlu0 %657
      %659 = vrot.lane.b32.xlu0 %v350, 124
      %v660 = vpop.permute.xlu0 %659
      %661 = vrot.lane.b32.xlu0 %v351, 124
      %v662 = vpop.permute.xlu0 %661
      %663 = vrot.lane.b32.xlu0 %v352, 124
      %v664 = vpop.permute.xlu0 %663
      %673 = vrot.lane.b32.xlu0 %v353, 124
      %v674 = vpop.permute.xlu0 %673
      %675 = vrot.lane.b32.xlu0 %v354, 124
      %v676 = vpop.permute.xlu0 %675
      %677 = vrot.lane.b32.xlu0 %v355, 124
      %v678 = vpop.permute.xlu0 %677
      %679 = vrot.lane.b32.xlu0 %v356, 124
      %v680 = vpop.permute.xlu0 %679
      %681 = vrot.lane.b32.xlu0 %v357, 124
      %v682 = vpop.permute.xlu0 %681
      %683 = vrot.lane.b32.xlu0 %v358, 124
      %v684 = vpop.permute.xlu0 %683
      %685 = vrot.lane.b32.xlu0 %v359, 124
      %v686 = vpop.permute.xlu0 %685
      %687 = vrot.lane.b32.xlu0 %v360, 124
      %v688 = vpop.permute.xlu0 %687
      %v689 = vunpack.c.l.b16 %v337
      %v690 = vunpack.c.l.b16 %v338
      %v691 = vunpack.c.l.b16 %v339
      %v692 = vunpack.c.l.b16 %v340
      %v693 = vpack.c.b16 %v690, %v689
      %v694 = vpack.c.b16 %v692, %v691
      %v695 = vunpack.c.l.b16 %v345
      %v696 = vunpack.c.l.b16 %v346
      %v697 = vunpack.c.l.b16 %v347
      %v698 = vunpack.c.l.b16 %v348
      %v699 = vpack.c.b16 %v696, %v695
      %v700 = vpack.c.b16 %v698, %v697
      %vm701 = vcmask 31744
      %v703 = vsel %vm701, %v693, 0
      %v706 = vsel %vm701, %v694, 0
      %v709 = vsel %vm701, %v699, 0
      %v712 = vsel %vm701, %v700, 0
      %714 = vmatprep.subr.bf16.mxu0 0
      %715 = vmatpush1.bf16.xpose.msra.mxu0 %v709
      %716 = vmatprep.subr.bf16.mxu0 0
      %717 = vmatpush1.bf16.xpose.msra.mxu0 %v712
      %718 = vmatprep.subr.bf16.mxu0 0
      %719 = vmatpush1.bf16.xpose.msra.mxu0 0
      %720 = vmatprep.subr.bf16.mxu0 0
      %721 = vmatpush1.bf16.xpose.msra.mxu0 0
      %722 = vmatprep.subr.bf16.mxu0 0
      %723 = vmatpush1.bf16.xpose.msra.mxu0 0
      %724 = vmatprep.subr.bf16.mxu0 0
      %725 = vmatpush1.bf16.xpose.msra.mxu0 0
      %726 = vmatprep.subr.bf16.mxu0 0
      %727 = vmatpush1.bf16.xpose.msra.mxu0 0
      %728 = vmatprep.subr.bf16.mxu0 0
      %729 = vmatpush1.bf16.xpose.msra.mxu0 0
      %730 = vmatprep.subr.bf16.mxu0 0
      %731 = vmatpush1.bf16.xpose.msra.mxu0 0
      %732 = vmatprep.subr.bf16.mxu0 0
      %733 = vmatpush1.bf16.xpose.msra.mxu0 0
      %734 = vmatprep.subr.bf16.mxu0 0
      %735 = vmatpush1.bf16.xpose.msra.mxu0 0
      %736 = vmatprep.subr.bf16.mxu0 0
      %737 = vmatpush1.bf16.xpose.msra.mxu0 0
      %738 = vmatprep.subr.bf16.mxu0 0
      %739 = vmatpush1.bf16.xpose.msra.mxu0 0
      %740 = vmatprep.subr.bf16.mxu0 0
      %741 = vmatpush1.bf16.xpose.msra.mxu0 0
      %742 = vmatprep.subr.bf16.mxu0 0
      %743 = vmatpush1.bf16.xpose.msra.mxu0 0
      %744 = vmatprep.subr.bf16.mxu0 0
      %745 = vmatpush1.bf16.xpose.msra.mxu0 0
      %746 = vmatprep.mubr.bf16.mxu0 0
      %747 = vmatmul.mubr.bf16.gmra.mrb[0].mxu0 %v703
      %v748 = vpop.f32.mrb[0].mxu0
      %v749 = vadd.f32 0.0, %v748
      %v750 = vpop.f32.mrb[0].mxu0
      %v751 = vpop.f32.mrb[0].mxu0
      %v752 = vadd.f32 0.0, %v751
      %v753 = vpop.f32.mrb[0].mxu0
      %754 = vmatprep.mubr.bf16.mxu0 0
      %755 = vmatmul.mubr.bf16.gmra.mrb[0].mxu0 %v706
      %v756 = vpop.f32.mrb[0].mxu0
      %v757 = vadd.f32 0.0, %v756
      %v758 = vpop.f32.mrb[0].mxu0
      %v759 = vpop.f32.mrb[0].mxu0
      %v760 = vadd.f32 0.0, %v759
      %v761 = vpop.f32.mrb[0].mxu0
      %762 = vdwg.mxu0
      %v763 = vunpack.c.l.b16 %v341
      %v764 = vunpack.c.l.b16 %v342
      %v765 = vunpack.c.l.b16 %v343
      %v766 = vunpack.c.l.b16 %v344
      %v767 = vpack.c.b16 %v764, %v763
      %v768 = vpack.c.b16 %v766, %v765
      %v769 = vunpack.c.l.b16 %v349
      %v770 = vunpack.c.l.b16 %v350
      %v771 = vunpack.c.l.b16 %v351
      %v772 = vunpack.c.l.b16 %v352
      %v773 = vpack.c.b16 %v770, %v769
      %v774 = vpack.c.b16 %v772, %v771
      %v776 = vsel %vm701, %v767, 0
      %v779 = vsel %vm701, %v768, 0
      %v782 = vsel %vm701, %v773, 0
      %v785 = vsel %vm701, %v774, 0
      %787 = vmatprep.subr.bf16.mxu0 0
      %788 = vmatpush1.bf16.xpose.msra.mxu0 %v782
      %789 = vmatprep.subr.bf16.mxu0 0
      %790 = vmatpush1.bf16.xpose.msra.mxu0 %v785
      %791 = vmatprep.subr.bf16.mxu0 0
      %792 = vmatpush1.bf16.xpose.msra.mxu0 0
      %793 = vmatprep.subr.bf16.mxu0 0
      %794 = vmatpush1.bf16.xpose.msra.mxu0 0
      %795 = vmatprep.subr.bf16.mxu0 0
      %796 = vmatpush1.bf16.xpose.msra.mxu0 0
      %797 = vmatprep.subr.bf16.mxu0 0
      %798 = vmatpush1.bf16.xpose.msra.mxu0 0
      %799 = vmatprep.subr.bf16.mxu0 0
      %800 = vmatpush1.bf16.xpose.msra.mxu0 0
      %801 = vmatprep.subr.bf16.mxu0 0
      %802 = vmatpush1.bf16.xpose.msra.mxu0 0
      %803 = vmatprep.subr.bf16.mxu0 0
      %804 = vmatpush1.bf16.xpose.msra.mxu0 0
      %805 = vmatprep.subr.bf16.mxu0 0
      %806 = vmatpush1.bf16.xpose.msra.mxu0 0
      %807 = vmatprep.subr.bf16.mxu0 0
      %808 = vmatpush1.bf16.xpose.msra.mxu0 0
      %809 = vmatprep.subr.bf16.mxu0 0
      %810 = vmatpush1.bf16.xpose.msra.mxu0 0
      %811 = vmatprep.subr.bf16.mxu0 0
      %812 = vmatpush1.bf16.xpose.msra.mxu0 0
      %813 = vmatprep.subr.bf16.mxu0 0
      %814 = vmatpush1.bf16.xpose.msra.mxu0 0
      %815 = vmatprep.subr.bf16.mxu0 0
      %816 = vmatpush1.bf16.xpose.msra.mxu0 0
      %817 = vmatprep.subr.bf16.mxu0 0
      %818 = vmatpush1.bf16.xpose.msra.mxu0 0
      %819 = vmatprep.mubr.bf16.mxu0 0
      %820 = vmatmul.mubr.bf16.gmra.mrb[0].mxu0 %v776
      %v821 = vpop.f32.mrb[0].mxu0
      %v822 = vadd.f32 0.0, %v821
      %v823 = vpop.f32.mrb[0].mxu0
      %v824 = vpop.f32.mrb[0].mxu0
      %v825 = vadd.f32 0.0, %v824
      %v826 = vpop.f32.mrb[0].mxu0
      %827 = vmatprep.mubr.bf16.mxu0 0
      %828 = vmatmul.mubr.bf16.gmra.mrb[0].mxu0 %v779
      %v829 = vpop.f32.mrb[0].mxu0
      %v830 = vadd.f32 0.0, %v829
      %v831 = vpop.f32.mrb[0].mxu0
      %v832 = vpop.f32.mrb[0].mxu0
      %v833 = vadd.f32 0.0, %v832
      %v834 = vpop.f32.mrb[0].mxu0
      %835 = vdwg.mxu0
      %v836 = vunpack.c.l.b16 %v626
      %v837 = vunpack.c.l.b16 %v628
      %v838 = vunpack.c.l.b16 %v630
      %v839 = vunpack.c.l.b16 %v632
      %v840 = vpack.c.b16 %v837, %v836
      %v841 = vpack.c.b16 %v839, %v838
      %v842 = vunpack.c.l.b16 %v650
      %v843 = vunpack.c.l.b16 %v652
      %v844 = vunpack.c.l.b16 %v654
      %v845 = vunpack.c.l.b16 %v656
      %v846 = vpack.c.b16 %v843, %v842
      %v847 = vpack.c.b16 %v845, %v844
      %v849 = vsel %vm701, %v840, 0
      %v852 = vsel %vm701, %v841, 0
      %v855 = vsel %vm701, %v846, 0
      %v858 = vsel %vm701, %v847, 0
      %860 = vmatprep.subr.bf16.mxu0 0
      %861 = vmatpush1.bf16.xpose.msra.mxu0 %v855
      %862 = vmatprep.subr.bf16.mxu0 0
      %863 = vmatpush1.bf16.xpose.msra.mxu0 %v858
      %864 = vmatprep.subr.bf16.mxu0 0
      %865 = vmatpush1.bf16.xpose.msra.mxu0 0
      %866 = vmatprep.subr.bf16.mxu0 0
      %867 = vmatpush1.bf16.xpose.msra.mxu0 0
      %868 = vmatprep.subr.bf16.mxu0 0
      %869 = vmatpush1.bf16.xpose.msra.mxu0 0
      %870 = vmatprep.subr.bf16.mxu0 0
      %871 = vmatpush1.bf16.xpose.msra.mxu0 0
      %872 = vmatprep.subr.bf16.mxu0 0
      %873 = vmatpush1.bf16.xpose.msra.mxu0 0
      %874 = vmatprep.subr.bf16.mxu0 0
      %875 = vmatpush1.bf16.xpose.msra.mxu0 0
      %876 = vmatprep.subr.bf16.mxu0 0
      %877 = vmatpush1.bf16.xpose.msra.mxu0 0
      %878 = vmatprep.subr.bf16.mxu0 0
      %879 = vmatpush1.bf16.xpose.msra.mxu0 0
      %880 = vmatprep.subr.bf16.mxu0 0
      %881 = vmatpush1.bf16.xpose.msra.mxu0 0
      %882 = vmatprep.subr.bf16.mxu0 0
      %883 = vmatpush1.bf16.xpose.msra.mxu0 0
      %884 = vmatprep.subr.bf16.mxu0 0
      %885 = vmatpush1.bf16.xpose.msra.mxu0 0
      %886 = vmatprep.subr.bf16.mxu0 0
      %887 = vmatpush1.bf16.xpose.msra.mxu0 0
      %888 = vmatprep.subr.bf16.mxu0 0
      %889 = vmatpush1.bf16.xpose.msra.mxu0 0
      %890 = vmatprep.subr.bf16.mxu0 0
      %891 = vmatpush1.bf16.xpose.msra.mxu0 0
      %892 = vmatprep.mubr.bf16.mxu0 0
      %893 = vmatmul.mubr.bf16.gmra.mrb[0].mxu0 %v849
      %v894 = vpop.f32.mrb[0].mxu0
      %v895 = vadd.f32 0.0, %v894
      %v896 = vpop.f32.mrb[0].mxu0
      %v897 = vpop.f32.mrb[0].mxu0
      %v898 = vadd.f32 0.0, %v897
      %v899 = vpop.f32.mrb[0].mxu0
      %900 = vmatprep.mubr.bf16.mxu0 0
      %901 = vmatmul.mubr.bf16.gmra.mrb[0].mxu0 %v852
      %v902 = vpop.f32.mrb[0].mxu0
      %v903 = vadd.f32 0.0, %v902
      %v904 = vpop.f32.mrb[0].mxu0
      %v905 = vpop.f32.mrb[0].mxu0
      %v906 = vadd.f32 0.0, %v905
      %v907 = vpop.f32.mrb[0].mxu0
      %908 = vdwg.mxu0
      %v909 = vunpack.c.l.b16 %v634
      %v910 = vunpack.c.l.b16 %v636
      %v911 = vunpack.c.l.b16 %v638
      %v912 = vunpack.c.l.b16 %v640
      %v913 = vpack.c.b16 %v910, %v909
      %v914 = vpack.c.b16 %v912, %v911
      %v915 = vunpack.c.l.b16 %v658
      %v916 = vunpack.c.l.b16 %v660
      %v917 = vunpack.c.l.b16 %v662
      %v918 = vunpack.c.l.b16 %v664
      %v919 = vpack.c.b16 %v916, %v915
      %v920 = vpack.c.b16 %v918, %v917
      %v922 = vsel %vm701, %v913, 0
      %v925 = vsel %vm701, %v914, 0
      %v928 = vsel %vm701, %v919, 0
      %v931 = vsel %vm701, %v920, 0
      %933 = vmatprep.subr.bf16.mxu0 0
      %934 = vmatpush1.bf16.xpose.msra.mxu0 %v928
      %935 = vmatprep.subr.bf16.mxu0 0
      %936 = vmatpush1.bf16.xpose.msra.mxu0 %v931
      %937 = vmatprep.subr.bf16.mxu0 0
      %938 = vmatpush1.bf16.xpose.msra.mxu0 0
      %939 = vmatprep.subr.bf16.mxu0 0
      %940 = vmatpush1.bf16.xpose.msra.mxu0 0
      %941 = vmatprep.subr.bf16.mxu0 0
      %942 = vmatpush1.bf16.xpose.msra.mxu0 0
      %943 = vmatprep.subr.bf16.mxu0 0
      %944 = vmatpush1.bf16.xpose.msra.mxu0 0
      %945 = vmatprep.subr.bf16.mxu0 0
      %946 = vmatpush1.bf16.xpose.msra.mxu0 0
      %947 = vmatprep.subr.bf16.mxu0 0
      %948 = vmatpush1.bf16.xpose.msra.mxu0 0
      %949 = vmatprep.subr.bf16.mxu0 0
      %950 = vmatpush1.bf16.xpose.msra.mxu0 0
      %951 = vmatprep.subr.bf16.mxu0 0
      %952 = vmatpush1.bf16.xpose.msra.mxu0 0
      %953 = vmatprep.subr.bf16.mxu0 0
      %954 = vmatpush1.bf16.xpose.msra.mxu0 0
      %955 = vmatprep.subr.bf16.mxu0 0
      %956 = vmatpush1.bf16.xpose.msra.mxu0 0
      %957 = vmatprep.subr.bf16.mxu0 0
      %958 = vmatpush1.bf16.xpose.msra.mxu0 0
      %959 = vmatprep.subr.bf16.mxu0 0
      %960 = vmatpush1.bf16.xpose.msra.mxu0 0
      %961 = vmatprep.subr.bf16.mxu0 0
      %962 = vmatpush1.bf16.xpose.msra.mxu0 0
      %963 = vmatprep.subr.bf16.mxu0 0
      %964 = vmatpush1.bf16.xpose.msra.mxu0 0
      %965 = vmatprep.mubr.bf16.mxu0 0
      %966 = vmatmul.mubr.bf16.gmra.mrb[0].mxu0 %v922
      %v967 = vpop.f32.mrb[0].mxu0
      %v968 = vadd.f32 0.0, %v967
      %v969 = vpop.f32.mrb[0].mxu0
      %v970 = vpop.f32.mrb[0].mxu0
      %v971 = vadd.f32 0.0, %v970
      %v972 = vpop.f32.mrb[0].mxu0
      %973 = vmatprep.mubr.bf16.mxu0 0
      %974 = vmatmul.mubr.bf16.gmra.mrb[0].mxu0 %v925
      %v975 = vpop.f32.mrb[0].mxu0
      %v976 = vadd.f32 0.0, %v975
      %v977 = vpop.f32.mrb[0].mxu0
      %v978 = vpop.f32.mrb[0].mxu0
      %v979 = vadd.f32 0.0, %v978
      %v980 = vpop.f32.mrb[0].mxu0
      %981 = vdwg.mxu0
      %vm982 = vcmask 261120
      %v983 = vsel %vm982, %v749, -inf
      %984 = vmax.xlane.f32.xlu0 %v983
      %v985 = vpop.xlane.xlu0 %984
      %v986 = vsel %vm982, %v752, -inf
      %987 = vmax.xlane.f32.xlu0 %v986
      %v988 = vpop.xlane.xlu0 %987
      %v989 = vsel %vm982, %v757, -inf
      %990 = vmax.xlane.f32.xlu0 %v989
      %v991 = vpop.xlane.xlu0 %990
      %v992 = vsel %vm982, %v760, -inf
      %993 = vmax.xlane.f32.xlu0 %v992
      %v994 = vpop.xlane.xlu0 %993
      %v995 = vsel %vm982, %v822, -inf
      %996 = vmax.xlane.f32.xlu0 %v995
      %v997 = vpop.xlane.xlu0 %996
      %v998 = vsel %vm982, %v825, -inf
      %999 = vmax.xlane.f32.xlu0 %v998
      %v1000 = vpop.xlane.xlu0 %999
      %v1001 = vsel %vm982, %v830, -inf
      %1002 = vmax.xlane.f32.xlu0 %v1001
      %v1003 = vpop.xlane.xlu0 %1002
      %v1004 = vsel %vm982, %v833, -inf
      %1005 = vmax.xlane.f32.xlu0 %v1004
      %v1006 = vpop.xlane.xlu0 %1005
      %v1007 = vsel %vm982, %v895, -inf
      %1008 = vmax.xlane.f32.xlu0 %v1007
      %v1009 = vpop.xlane.xlu0 %1008
      %v1010 = vsel %vm982, %v898, -inf
      %1011 = vmax.xlane.f32.xlu0 %v1010
      %v1012 = vpop.xlane.xlu0 %1011
      %v1013 = vsel %vm982, %v903, -inf
      %1014 = vmax.xlane.f32.xlu0 %v1013
      %v1015 = vpop.xlane.xlu0 %1014
      %v1016 = vsel %vm982, %v906, -inf
      %1017 = vmax.xlane.f32.xlu0 %v1016
      %v1018 = vpop.xlane.xlu0 %1017
      %v1019 = vsel %vm982, %v968, -inf
      %1020 = vmax.xlane.f32.xlu0 %v1019
      %v1021 = vpop.xlane.xlu0 %1020
      %v1022 = vsel %vm982, %v971, -inf
      %1023 = vmax.xlane.f32.xlu0 %v1022
      %v1024 = vpop.xlane.xlu0 %1023
      %v1025 = vsel %vm982, %v976, -inf
      %1026 = vmax.xlane.f32.xlu0 %v1025
      %v1027 = vpop.xlane.xlu0 %1026
      %v1028 = vsel %vm982, %v979, -inf
      %1029 = vmax.xlane.f32.xlu0 %v1028
      %v1030 = vpop.xlane.xlu0 %1029
      %v1031 = vsub.f32 %v749, %v985
      %v1032 = vsub.f32 %v752, %v988
      %v1033 = vsub.f32 %v757, %v991
      %v1034 = vsub.f32 %v760, %v994
      %v1035 = vsub.f32 %v822, %v997
      %v1036 = vsub.f32 %v825, %v1000
      %v1037 = vsub.f32 %v830, %v1003
      %v1038 = vsub.f32 %v833, %v1006
      %v1039 = vsub.f32 %v895, %v1009
      %v1040 = vsub.f32 %v898, %v1012
      %v1041 = vsub.f32 %v903, %v1015
      %v1042 = vsub.f32 %v906, %v1018
      %v1043 = vsub.f32 %v968, %v1021
      %v1044 = vsub.f32 %v971, %v1024
      %v1045 = vsub.f32 %v976, %v1027
      %v1046 = vsub.f32 %v979, %v1030
      %v1047 = vmul.f32 %v1031, 1.442695
      %v1048 = vpow.pop %v1047
      %v1049 = vmul.f32 %v1032, 1.442695
      %v1050 = vpow.pop %v1049
      %v1051 = vmul.f32 %v1033, 1.442695
      %v1052 = vpow.pop %v1051
      %v1053 = vmul.f32 %v1034, 1.442695
      %v1054 = vpow.pop %v1053
      %v1055 = vmul.f32 %v1035, 1.442695
      %v1056 = vpow.pop %v1055
      %v1057 = vmul.f32 %v1036, 1.442695
      %v1058 = vpow.pop %v1057
      %v1059 = vmul.f32 %v1037, 1.442695
      %v1060 = vpow.pop %v1059
      %v1061 = vmul.f32 %v1038, 1.442695
      %v1062 = vpow.pop %v1061
      %v1063 = vmul.f32 %v1039, 1.442695
      %v1064 = vpow.pop %v1063
      %v1065 = vmul.f32 %v1040, 1.442695
      %v1066 = vpow.pop %v1065
      %v1067 = vmul.f32 %v1041, 1.442695
      %v1068 = vpow.pop %v1067
      %v1069 = vmul.f32 %v1042, 1.442695
      %v1070 = vpow.pop %v1069
      %v1071 = vmul.f32 %v1043, 1.442695
      %v1072 = vpow.pop %v1071
      %v1073 = vmul.f32 %v1044, 1.442695
      %v1074 = vpow.pop %v1073
      %v1075 = vmul.f32 %v1045, 1.442695
      %v1076 = vpow.pop %v1075
      %v1077 = vmul.f32 %v1046, 1.442695
      %v1078 = vpow.pop %v1077
      %v1079 = vsel %vm982, %v1048, 0.0
      %1080 = vadd.xlane.f32.xlu0 %v1079
      %v1081 = vpop.xlane.xlu0 %1080
      %v1082 = vsel %vm982, %v1050, 0.0
      %1083 = vadd.xlane.f32.xlu0 %v1082
      %v1084 = vpop.xlane.xlu0 %1083
      %v1085 = vsel %vm982, %v1052, 0.0
      %1086 = vadd.xlane.f32.xlu0 %v1085
      %v1087 = vpop.xlane.xlu0 %1086
      %v1088 = vsel %vm982, %v1054, 0.0
      %1089 = vadd.xlane.f32.xlu0 %v1088
      %v1090 = vpop.xlane.xlu0 %1089
      %v1091 = vsel %vm982, %v1056, 0.0
      %1092 = vadd.xlane.f32.xlu0 %v1091
      %v1093 = vpop.xlane.xlu0 %1092
      %v1094 = vsel %vm982, %v1058, 0.0
      %1095 = vadd.xlane.f32.xlu0 %v1094
      %v1096 = vpop.xlane.xlu0 %1095
      %v1097 = vsel %vm982, %v1060, 0.0
      %1098 = vadd.xlane.f32.xlu0 %v1097
      %v1099 = vpop.xlane.xlu0 %1098
      %v1100 = vsel %vm982, %v1062, 0.0
      %1101 = vadd.xlane.f32.xlu0 %v1100
      %v1102 = vpop.xlane.xlu0 %1101
      %v1103 = vsel %vm982, %v1064, 0.0
      %1104 = vadd.xlane.f32.xlu0 %v1103
      %v1105 = vpop.xlane.xlu0 %1104
      %v1106 = vsel %vm982, %v1066, 0.0
      %1107 = vadd.xlane.f32.xlu0 %v1106
      %v1108 = vpop.xlane.xlu0 %1107
      %v1109 = vsel %vm982, %v1068, 0.0
      %1110 = vadd.xlane.f32.xlu0 %v1109
      %v1111 = vpop.xlane.xlu0 %1110
      %v1112 = vsel %vm982, %v1070, 0.0
      %1113 = vadd.xlane.f32.xlu0 %v1112
      %v1114 = vpop.xlane.xlu0 %1113
      %v1115 = vsel %vm982, %v1072, 0.0
      %1116 = vadd.xlane.f32.xlu0 %v1115
      %v1117 = vpop.xlane.xlu0 %1116
      %v1118 = vsel %vm982, %v1074, 0.0
      %1119 = vadd.xlane.f32.xlu0 %v1118
      %v1120 = vpop.xlane.xlu0 %1119
      %v1121 = vsel %vm982, %v1076, 0.0
      %1122 = vadd.xlane.f32.xlu0 %v1121
      %v1123 = vpop.xlane.xlu0 %1122
      %v1124 = vsel %vm982, %v1078, 0.0
      %1125 = vadd.xlane.f32.xlu0 %v1124
      %v1126 = vpop.xlane.xlu0 %1125
      %v1127 = vrcp.pop %v1081
      %v1128 = vrcp.pop %v1084
      %v1129 = vrcp.pop %v1087
      %v1130 = vrcp.pop %v1090
      %v1131 = vrcp.pop %v1093
      %v1132 = vrcp.pop %v1096
      %v1133 = vrcp.pop %v1099
      %v1134 = vrcp.pop %v1102
      %v1135 = vrcp.pop %v1105
      %v1136 = vrcp.pop %v1108
      %v1137 = vrcp.pop %v1111
      %v1138 = vrcp.pop %v1114
      %v1139 = vrcp.pop %v1117
      %v1140 = vrcp.pop %v1120
      %v1141 = vrcp.pop %v1123
      %v1142 = vrcp.pop %v1126
      %v1143 = vpack.c.bf16 %v1050, %v1048
      %v1144 = vpack.c.bf16 %v1054, %v1052
      %v1145 = vpack.c.bf16 %v1058, %v1056
      %v1146 = vpack.c.bf16 %v1062, %v1060
      %v1147 = vpack.c.bf16 %v1066, %v1064
      %v1148 = vpack.c.bf16 %v1070, %v1068
      %v1149 = vpack.c.bf16 %v1074, %v1072
      %v1150 = vpack.c.bf16 %v1078, %v1076
      %v1151 = vunpack.c.l.b16 %v353
      %v1152 = vunpack.c.l.b16 %v354
      %v1153 = vunpack.c.l.b16 %v355
      %v1154 = vunpack.c.l.b16 %v356
      %v1155 = vpack.c.b16 %v1152, %v1151
      %v1156 = vpack.c.b16 %v1154, %v1153
      %v1160 = vsel %vm982, %v1143, 0
      %v1163 = vsel %vm982, %v1144, 0
      %1165 = vmatprep.subr.bf16.mxu0 0
      %1166 = vmatpush1.bf16.msra.mxu0 %v1155
      %1167 = vmatprep.subr.bf16.mxu0 0
      %1168 = vmatpush1.bf16.msra.mxu0 %v1156
      %1169 = vmatprep.subr.bf16.mxu0 0
      %1170 = vmatpush1.bf16.msra.mxu0 0
      %1171 = vmatprep.subr.bf16.mxu0 0
      %1172 = vmatpush1.bf16.msra.mxu0 0
      %1173 = vmatprep.subr.bf16.mxu0 0
      %1174 = vmatpush1.bf16.msra.mxu0 0
      %1175 = vmatprep.subr.bf16.mxu0 0
      %1176 = vmatpush1.bf16.msra.mxu0 0
      %1177 = vmatprep.subr.bf16.mxu0 0
      %1178 = vmatpush1.bf16.msra.mxu0 0
      %1179 = vmatprep.subr.bf16.mxu0 0
      %1180 = vmatpush1.bf16.msra.mxu0 0
      %1181 = vmatprep.subr.bf16.mxu0 0
      %1182 = vmatpush1.bf16.msra.mxu0 0
      %1183 = vmatprep.subr.bf16.mxu0 0
      %1184 = vmatpush1.bf16.msra.mxu0 0
      %1185 = vmatprep.subr.bf16.mxu0 0
      %1186 = vmatpush1.bf16.msra.mxu0 0
      %1187 = vmatprep.subr.bf16.mxu0 0
      %1188 = vmatpush1.bf16.msra.mxu0 0
      %1189 = vmatprep.subr.bf16.mxu0 0
      %1190 = vmatpush1.bf16.msra.mxu0 0
      %1191 = vmatprep.subr.bf16.mxu0 0
      %1192 = vmatpush1.bf16.msra.mxu0 0
      %1193 = vmatprep.subr.bf16.mxu0 0
      %1194 = vmatpush1.bf16.msra.mxu0 0
      %1195 = vmatprep.subr.bf16.mxu0 0
      %1196 = vmatpush1.bf16.msra.mxu0 0
      %1197 = vmatprep.mubr.bf16.mxu0 0
      %1198 = vmatmul.mubr.bf16.gmra.mrb[0].mxu0 %v1160
      %v1199 = vpop.f32.mrb[0].mxu0
      %v1200 = vadd.f32 0.0, %v1199
      %v1201 = vpop.f32.mrb[0].mxu0
      %v1202 = vpop.f32.mrb[0].mxu0
      %v1203 = vadd.f32 0.0, %v1202
      %v1204 = vpop.f32.mrb[0].mxu0
      %1205 = vmatprep.mubr.bf16.mxu0 0
      %1206 = vmatmul.mubr.bf16.gmra.mrb[0].mxu0 %v1163
      %v1207 = vpop.f32.mrb[0].mxu0
      %v1208 = vadd.f32 0.0, %v1207
      %v1209 = vpop.f32.mrb[0].mxu0
      %v1210 = vpop.f32.mrb[0].mxu0
      %v1211 = vadd.f32 0.0, %v1210
      %v1212 = vpop.f32.mrb[0].mxu0
      %1213 = vdwg.mxu0
      %v1214 = vunpack.c.l.b16 %v357
      %v1215 = vunpack.c.l.b16 %v358
      %v1216 = vunpack.c.l.b16 %v359
      %v1217 = vunpack.c.l.b16 %v360
      %v1218 = vpack.c.b16 %v1215, %v1214
      %v1219 = vpack.c.b16 %v1217, %v1216
      %v1223 = vsel %vm982, %v1145, 0
      %v1226 = vsel %vm982, %v1146, 0
      %1228 = vmatprep.subr.bf16.mxu0 0
      %1229 = vmatpush1.bf16.msra.mxu0 %v1218
      %1230 = vmatprep.subr.bf16.mxu0 0
      %1231 = vmatpush1.bf16.msra.mxu0 %v1219
      %1232 = vmatprep.subr.bf16.mxu0 0
      %1233 = vmatpush1.bf16.msra.mxu0 0
      %1234 = vmatprep.subr.bf16.mxu0 0
      %1235 = vmatpush1.bf16.msra.mxu0 0
      %1236 = vmatprep.subr.bf16.mxu0 0
      %1237 = vmatpush1.bf16.msra.mxu0 0
      %1238 = vmatprep.subr.bf16.mxu0 0
      %1239 = vmatpush1.bf16.msra.mxu0 0
      %1240 = vmatprep.subr.bf16.mxu0 0
      %1241 = vmatpush1.bf16.msra.mxu0 0
      %1242 = vmatprep.subr.bf16.mxu0 0
      %1243 = vmatpush1.bf16.msra.mxu0 0
      %1244 = vmatprep.subr.bf16.mxu0 0
      %1245 = vmatpush1.bf16.msra.mxu0 0
      %1246 = vmatprep.subr.bf16.mxu0 0
      %1247 = vmatpush1.bf16.msra.mxu0 0
      %1248 = vmatprep.subr.bf16.mxu0 0
      %1249 = vmatpush1.bf16.msra.mxu0 0
      %1250 = vmatprep.subr.bf16.mxu0 0
      %1251 = vmatpush1.bf16.msra.mxu0 0
      %1252 = vmatprep.subr.bf16.mxu0 0
      %1253 = vmatpush1.bf16.msra.mxu0 0
      %1254 = vmatprep.subr.bf16.mxu0 0
      %1255 = vmatpush1.bf16.msra.mxu0 0
      %1256 = vmatprep.subr.bf16.mxu0 0
      %1257 = vmatpush1.bf16.msra.mxu0 0
      %1258 = vmatprep.subr.bf16.mxu0 0
      %1259 = vmatpush1.bf16.msra.mxu0 0
      %1260 = vmatprep.mubr.bf16.mxu0 0
      %1261 = vmatmul.mubr.bf16.gmra.mrb[0].mxu0 %v1223
      %v1262 = vpop.f32.mrb[0].mxu0
      %v1263 = vadd.f32 0.0, %v1262
      %v1264 = vpop.f32.mrb[0].mxu0
      %v1265 = vpop.f32.mrb[0].mxu0
      %v1266 = vadd.f32 0.0, %v1265
      %v1267 = vpop.f32.mrb[0].mxu0
      %1268 = vmatprep.mubr.bf16.mxu0 0
      %1269 = vmatmul.mubr.bf16.gmra.mrb[0].mxu0 %v1226
      %v1270 = vpop.f32.mrb[0].mxu0
      %v1271 = vadd.f32 0.0, %v1270
      %v1272 = vpop.f32.mrb[0].mxu0
      %v1273 = vpop.f32.mrb[0].mxu0
      %v1274 = vadd.f32 0.0, %v1273
      %v1275 = vpop.f32.mrb[0].mxu0
      %1276 = vdwg.mxu0
      %v1277 = vunpack.c.l.b16 %v674
      %v1278 = vunpack.c.l.b16 %v676
      %v1279 = vunpack.c.l.b16 %v678
      %v1280 = vunpack.c.l.b16 %v680
      %v1281 = vpack.c.b16 %v1278, %v1277
      %v1282 = vpack.c.b16 %v1280, %v1279
      %v1286 = vsel %vm982, %v1147, 0
      %v1289 = vsel %vm982, %v1148, 0
      %1291 = vmatprep.subr.bf16.mxu0 0
      %1292 = vmatpush1.bf16.msra.mxu0 %v1281
      %1293 = vmatprep.subr.bf16.mxu0 0
      %1294 = vmatpush1.bf16.msra.mxu0 %v1282
      %1295 = vmatprep.subr.bf16.mxu0 0
      %1296 = vmatpush1.bf16.msra.mxu0 0
      %1297 = vmatprep.subr.bf16.mxu0 0
      %1298 = vmatpush1.bf16.msra.mxu0 0
      %1299 = vmatprep.subr.bf16.mxu0 0
      %1300 = vmatpush1.bf16.msra.mxu0 0
      %1301 = vmatprep.subr.bf16.mxu0 0
      %1302 = vmatpush1.bf16.msra.mxu0 0
      %1303 = vmatprep.subr.bf16.mxu0 0
      %1304 = vmatpush1.bf16.msra.mxu0 0
      %1305 = vmatprep.subr.bf16.mxu0 0
      %1306 = vmatpush1.bf16.msra.mxu0 0
      %1307 = vmatprep.subr.bf16.mxu0 0
      %1308 = vmatpush1.bf16.msra.mxu0 0
      %1309 = vmatprep.subr.bf16.mxu0 0
      %1310 = vmatpush1.bf16.msra.mxu0 0
      %1311 = vmatprep.subr.bf16.mxu0 0
      %1312 = vmatpush1.bf16.msra.mxu0 0
      %1313 = vmatprep.subr.bf16.mxu0 0
      %1314 = vmatpush1.bf16.msra.mxu0 0
      %1315 = vmatprep.subr.bf16.mxu0 0
      %1316 = vmatpush1.bf16.msra.mxu0 0
      %1317 = vmatprep.subr.bf16.mxu0 0
      %1318 = vmatpush1.bf16.msra.mxu0 0
      %1319 = vmatprep.subr.bf16.mxu0 0
      %1320 = vmatpush1.bf16.msra.mxu0 0
      %1321 = vmatprep.subr.bf16.mxu0 0
      %1322 = vmatpush1.bf16.msra.mxu0 0
      %1323 = vmatprep.mubr.bf16.mxu0 0
      %1324 = vmatmul.mubr.bf16.gmra.mrb[0].mxu0 %v1286
      %v1325 = vpop.f32.mrb[0].mxu0
      %v1326 = vadd.f32 0.0, %v1325
      %v1327 = vpop.f32.mrb[0].mxu0
      %v1328 = vpop.f32.mrb[0].mxu0
      %v1329 = vadd.f32 0.0, %v1328
      %v1330 = vpop.f32.mrb[0].mxu0
      %1331 = vmatprep.mubr.bf16.mxu0 0
      %1332 = vmatmul.mubr.bf16.gmra.mrb[0].mxu0 %v1289
      %v1333 = vpop.f32.mrb[0].mxu0
      %v1334 = vadd.f32 0.0, %v1333
      %v1335 = vpop.f32.mrb[0].mxu0
      %v1336 = vpop.f32.mrb[0].mxu0
      %v1337 = vadd.f32 0.0, %v1336
      %v1338 = vpop.f32.mrb[0].mxu0
      %1339 = vdwg.mxu0
      %v1340 = vunpack.c.l.b16 %v682
      %v1341 = vunpack.c.l.b16 %v684
      %v1342 = vunpack.c.l.b16 %v686
      %v1343 = vunpack.c.l.b16 %v688
      %v1344 = vpack.c.b16 %v1341, %v1340
      %v1345 = vpack.c.b16 %v1343, %v1342
      %v1349 = vsel %vm982, %v1149, 0
      %v1352 = vsel %vm982, %v1150, 0
      %1354 = vmatprep.subr.bf16.mxu0 0
      %1355 = vmatpush1.bf16.msra.mxu0 %v1344
      %1356 = vmatprep.subr.bf16.mxu0 0
      %1357 = vmatpush1.bf16.msra.mxu0 %v1345
      %1358 = vmatprep.subr.bf16.mxu0 0
      %1359 = vmatpush1.bf16.msra.mxu0 0
      %1360 = vmatprep.subr.bf16.mxu0 0
      %1361 = vmatpush1.bf16.msra.mxu0 0
      %1362 = vmatprep.subr.bf16.mxu0 0
      %1363 = vmatpush1.bf16.msra.mxu0 0
      %1364 = vmatprep.subr.bf16.mxu0 0
      %1365 = vmatpush1.bf16.msra.mxu0 0
      %1366 = vmatprep.subr.bf16.mxu0 0
      %1367 = vmatpush1.bf16.msra.mxu0 0
      %1368 = vmatprep.subr.bf16.mxu0 0
      %1369 = vmatpush1.bf16.msra.mxu0 0
      %1370 = vmatprep.subr.bf16.mxu0 0
      %1371 = vmatpush1.bf16.msra.mxu0 0
      %1372 = vmatprep.subr.bf16.mxu0 0
      %1373 = vmatpush1.bf16.msra.mxu0 0
      %1374 = vmatprep.subr.bf16.mxu0 0
      %1375 = vmatpush1.bf16.msra.mxu0 0
      %1376 = vmatprep.subr.bf16.mxu0 0
      %1377 = vmatpush1.bf16.msra.mxu0 0
      %1378 = vmatprep.subr.bf16.mxu0 0
      %1379 = vmatpush1.bf16.msra.mxu0 0
      %1380 = vmatprep.subr.bf16.mxu0 0
      %1381 = vmatpush1.bf16.msra.mxu0 0
      %1382 = vmatprep.subr.bf16.mxu0 0
      %1383 = vmatpush1.bf16.msra.mxu0 0
      %1384 = vmatprep.subr.bf16.mxu0 0
      %1385 = vmatpush1.bf16.msra.mxu0 0
      %1386 = vmatprep.mubr.bf16.mxu0 0
      %1387 = vmatmul.mubr.bf16.gmra.mrb[0].mxu0 %v1349
      %v1388 = vpop.f32.mrb[0].mxu0
      %v1389 = vadd.f32 0.0, %v1388
      %v1390 = vpop.f32.mrb[0].mxu0
      %v1391 = vpop.f32.mrb[0].mxu0
      %v1392 = vadd.f32 0.0, %v1391
      %v1393 = vpop.f32.mrb[0].mxu0
      %1394 = vmatprep.mubr.bf16.mxu0 0
      %1395 = vmatmul.mubr.bf16.gmra.mrb[0].mxu0 %v1352
      %v1396 = vpop.f32.mrb[0].mxu0
      %v1397 = vadd.f32 0.0, %v1396
      %v1398 = vpop.f32.mrb[0].mxu0
      %v1399 = vpop.f32.mrb[0].mxu0
      %v1400 = vadd.f32 0.0, %v1399
      %v1401 = vpop.f32.mrb[0].mxu0
      %1402 = vdwg.mxu0
      %v1403 = vmul.f32 %v1200, %v1127
      %v1404 = vmul.f32 %v1203, %v1128
      %v1405 = vmul.f32 %v1208, %v1129
      %v1406 = vmul.f32 %v1211, %v1130
      %v1407 = vmul.f32 %v1263, %v1131
      %v1408 = vmul.f32 %v1266, %v1132
      %v1409 = vmul.f32 %v1271, %v1133
      %v1410 = vmul.f32 %v1274, %v1134
      %v1411 = vmul.f32 %v1326, %v1135
      %v1412 = vmul.f32 %v1329, %v1136
      %v1413 = vmul.f32 %v1334, %v1137
      %v1414 = vmul.f32 %v1337, %v1138
      %v1415 = vmul.f32 %v1389, %v1139
      %v1416 = vmul.f32 %v1392, %v1140
      %v1417 = vmul.f32 %v1397, %v1141
      %v1418 = vmul.f32 %v1400, %v1142
      %1427 = vrot.lane.b32.xlu0 %v1411, 4
      %v1428 = vpop.permute.xlu0 %1427
      %1429 = vrot.lane.b32.xlu0 %v1412, 4
      %v1430 = vpop.permute.xlu0 %1429
      %1431 = vrot.lane.b32.xlu0 %v1413, 4
      %v1432 = vpop.permute.xlu0 %1431
      %1433 = vrot.lane.b32.xlu0 %v1414, 4
      %v1434 = vpop.permute.xlu0 %1433
      %1435 = vrot.lane.b32.xlu0 %v1415, 4
      %v1436 = vpop.permute.xlu0 %1435
      %1437 = vrot.lane.b32.xlu0 %v1416, 4
      %v1438 = vpop.permute.xlu0 %1437
      %1439 = vrot.lane.b32.xlu0 %v1417, 4
      %v1440 = vpop.permute.xlu0 %1439
      %1441 = vrot.lane.b32.xlu0 %v1418, 4
      %v1442 = vpop.permute.xlu0 %1441
      %v1451 = vsel %vm701, %v1403, %v1428
      %v1452 = vsel %vm701, %v1404, %v1430
      %v1453 = vsel %vm701, %v1405, %v1432
      %v1454 = vsel %vm701, %v1406, %v1434
      %v1455 = vsel %vm701, %v1407, %v1436
      %v1456 = vsel %vm701, %v1408, %v1438
      %v1457 = vsel %vm701, %v1409, %v1440
      %v1458 = vsel %vm701, %v1410, %v1442
      %v1459 = vadd.f32 %v1451, %v609
      %v1460 = vadd.f32 %v1452, %v610
      %v1461 = vadd.f32 %v1453, %v611
      %v1462 = vadd.f32 %v1454, %v612
      %v1463 = vadd.f32 %v1455, %v613
      %v1464 = vadd.f32 %v1456, %v614
      %v1465 = vadd.f32 %v1457, %v615
      %v1466 = vadd.f32 %v1458, %v616
      %v1467 = vpack.c.bf16 %v1459, %v1459
      %v1468 = vpack.c.bf16 %v1460, %v1460
      %v1469 = vpack.c.bf16 %v1461, %v1461
      %v1470 = vpack.c.bf16 %v1462, %v1462
      %v1471 = vpack.c.bf16 %v1463, %v1463
      %v1472 = vpack.c.bf16 %v1464, %v1464
      %v1473 = vpack.c.bf16 %v1465, %v1465
      %v1474 = vpack.c.bf16 %v1466, %v1466
      %vm1475 = vcmask 60416
      %1476 = vst.msk [vmem:[%s334] sm:$0xf] %vm1475, %v1467
      %1477 = vst.msk [vmem:[%s334 + $0x4] sm:$0xf] %vm1475, %v1468
      %1478 = vst.msk [vmem:[%s334 + $0x8] sm:$0xf] %vm1475, %v1469
      %1479 = vst.msk [vmem:[%s334 + $0xc] sm:$0xf] %vm1475, %v1470
      %1480 = vst.msk [vmem:[%s334 + $0x10] sm:$0xf] %vm1475, %v1471
      %1481 = vst.msk [vmem:[%s334 + $0x14] sm:$0xf] %vm1475, %v1472
      %1482 = vst.msk [vmem:[%s334 + $0x18] sm:$0xf] %vm1475, %v1473
      %1483 = vst.msk [vmem:[%s334 + $0x1c] sm:$0xf] %vm1475, %v1474
      %s1484 = smul.u32 8, %s21
      %p1485 = scmp.lt.s32.totalorder %s20, 1
      %s1486 = scalar_select %p1485, %s20, 1
      %p1487 = scmp.lt.s32.totalorder %s1484, 7
      %s1488 = scalar_select %p1487, %s1484, 7
      %s1489 = smul.addr %s1486, 8
      %s1490 = sadd.s32 %s1488, %s1489
      %s1491 = smul.addr %s1490, 4
      %s1492 = scalar_lea.vmem %s5, %s1491
      // Predicated region
      $region41: #{cross_window_attention.6} parent=39 // pred_check
        %p1493 = pneg %p174
      $region42: #{cross_window_attention.6} parent=39 // pred_check_branch
        %1495 = sbr.rel (%p1493) target = $region44
      $region43: #{cross_window_attention.6} parent=39 // pred_region
        %s1496 = smul.u32 8, %s21
      $region44: #{cross_window_attention.6} parent=39 // pred_fallthru
        _
    $region40: #{cross_window_attention.6} parent=5 // pred_fallthru
      _
    %p1497 = scmp.le.s32.totalorder 2, %s11
    // Predicated region
    $region45: #{cross_window_attention.6} parent=5 // pred_check
      %p1498 = pneg %p1497
    $region46: #{cross_window_attention.6} parent=5 // pred_check_branch
      %1500 = sbr.rel (%p1498) target = $region48
    $region47: #{cross_window_attention.6} parent=5 // pred_region
      %s1501 = ssub.s32 %s11, 2
      // Predicated region
      $region49: #{cross_window_attention.6} parent=47 // pred_check
        %p1502 = pneg %p180
      $region50: #{cross_window_attention.6} parent=47 // pred_check_branch
        %1504 = sbr.rel (%p1502) target = $region52
      $region51: #{cross_window_attention.6} parent=47 // pred_region
        %s1505 = smul.u32 8, %s23
        %p1506 = scmp.lt.s32.totalorder %s22, 1
        %s1507 = scalar_select %p1506, %s22, 1
        %p1508 = scmp.lt.s32.totalorder %s1505, 7
        %s1509 = scalar_select %p1508, %s1505, 7
        %s1510 = smul.addr %s1507, 8
        %s1511 = sadd.s32 %s1509, %s1510
        %s1512 = smul.addr %s1511, 4
        %s1513 = scalar_lea.vmem %s5, %s1512
      $region52: #{cross_window_attention.6} parent=47 // pred_fallthru
        _
    $region48: #{cross_window_attention.6} parent=5 // pred_fallthru
      _
  $region6: #{cross_window_attention.6} parent=0 // loop_footer
    %s15 = sadd.s32 1, %s11
  $region7: #{cross_window_attention.6} parent=0 // loop_footer_branch
    %10 = sbr.rel target = $region3
  $region8: #{cross_window_attention.6} parent=0 // loop_exit
    _

</llo_original>
